<compile_context>
chip_gen: v6e
topology: v6e:2x2x1
jax: 0.10.0
libtpu: 0.0.40
codegen_flags: <defaults>
</compile_context>

<pallas_src>
import functools

import jax
import jax.numpy as jnp
from jax.experimental import pallas as pl
from jax.experimental.pallas import tpu as pltpu


def _round_up(x, m):
    return (x + m - 1) // m * m


def _mlp_kernel(x_ref, w1_ref, b1_ref, w2_ref, b2_ref, o_ref):
    # x_ref : [bm, in_dim]   (f32)      w1_ref: [in_dim, hidden]  (bf16)
    # b1_ref: [1, hidden]    (f32)      w2_ref: [hidden, out_pad] (bf16)
    # b2_ref: [1, out_pad]   (f32)      o_ref : [bm, out_pad]     (f32)
    x = x_ref[...].astype(jnp.bfloat16)                     # in-kernel cast
    h = jnp.dot(x, w1_ref[...], preferred_element_type=jnp.float32)
    h = jnp.maximum(h + b1_ref[...], 0.0)                   # f32 bias + ReLU
    y = jnp.dot(h.astype(jnp.bfloat16), w2_ref[...],
                preferred_element_type=jnp.float32)
    o_ref[...] = y + b2_ref[...]


def prepare_mlp_params(w1, b1, w2, b2):
    """One-time conversion of params to kernel layout/dtype.

    Weights are in [in, out] layout (transposed vs. torch nn.Linear).
    Biases may be (N,) or (1, N). Returns (params_tuple, out_dim).
    Call this ONCE (outside the hot path); pass the result to mlp_forward.
    """
    b1 = jnp.asarray(b1).reshape(1, -1)
    b2 = jnp.asarray(b2).reshape(1, -1)
    out_dim = w2.shape[1]
    out_pad = _round_up(out_dim, 128)          # lane-dense output store
    if out_pad != out_dim:
        w2 = jnp.pad(w2, ((0, 0), (0, out_pad - out_dim)))
        b2 = jnp.pad(b2, ((0, 0), (0, out_pad - out_dim)))
    params = (w1.astype(jnp.bfloat16), b1.astype(jnp.float32),
              w2.astype(jnp.bfloat16), b2.astype(jnp.float32))
    return params, out_dim


@functools.partial(jax.jit, static_argnames=("out_dim", "block_b"))
def mlp_forward(x, params, *, out_dim, block_b=1024):
    """x: [B, in_dim] f32 -> [B, out_dim] f32. Fused Linear->ReLU->Linear.

    `params` must come from prepare_mlp_params (bf16 weights, padded out dim).
    """
    assert block_b % 256 == 0, "block_b must be a multiple of 256"
    w1, b1, w2, b2 = params
    B, in_dim = x.shape
    hidden = w1.shape[1]
    out_pad = w2.shape[1]

    # --- batch tiling: big tiles to amortize the ~0.35us per-grid-step cost,
    # but never bigger than the (256-rounded) batch itself.
    bm = min(block_b, _round_up(B, 256))
    b_pad = _round_up(B, bm)
    if b_pad != B:
        x = jnp.pad(x, ((0, b_pad - B), (0, 0)))

    grid = (b_pad // bm,)

    flops = 2 * b_pad * (in_dim * hidden + hidden * out_pad)
    bytes_accessed = (b_pad * in_dim * 4            # x (f32)
                      + in_dim * hidden * 2         # w1 (bf16)
                      + hidden * 4                  # b1
                      + hidden * out_pad * 2        # w2 (bf16)
                      + out_pad * 4                 # b2
                      + b_pad * out_pad * 4)        # out (f32)

    y = pl.pallas_call(
        _mlp_kernel,
        out_shape=jax.ShapeDtypeStruct((b_pad, out_pad), jnp.float32),
        grid_spec=pltpu.PrefetchScalarGridSpec(
            num_scalar_prefetch=0,
            grid=grid,
            in_specs=[
                # activations: pipelined (double-buffered) over the batch axis
                pl.BlockSpec((bm, in_dim), lambda i: (i, 0)),
                # weights / biases: VMEM-resident, constant block -> 1 buffer
                pl.BlockSpec((in_dim, hidden), lambda i: (0, 0),
                             pipeline_mode=pl.Buffered(1)),
                pl.BlockSpec((1, hidden), lambda i: (0, 0),
                             pipeline_mode=pl.Buffered(1)),
                pl.BlockSpec((hidden, out_pad), lambda i: (0, 0),
                             pipeline_mode=pl.Buffered(1)),
                pl.BlockSpec((1, out_pad), lambda i: (0, 0),
                             pipeline_mode=pl.Buffered(1)),
            ],
            out_specs=pl.BlockSpec((bm, out_pad), lambda i: (i, 0)),
        ),
        compiler_params=pltpu.CompilerParams(
            dimension_semantics=("parallel",),
            # v5e default scoped VMEM is 16 MiB; large tiles need more.
            # 48 MiB fits every generation (v7x physical = 64 MiB per TC).
            vmem_limit_bytes=48 * 1024 * 1024,
        ),
        cost_estimate=pl.CostEstimate(
            flops=flops, transcendentals=0, bytes_accessed=bytes_accessed),
    )(x, w1, b1, w2, b2)

    # Slice away batch / output-column padding.
    return y[:B, :out_dim]


def init_params(key, in_dim, hidden, out_dim, dtype=jnp.float32):
    """PyTorch-nn.Linear-style init (uniform +/- 1/sqrt(fan_in)).

    Weights already transposed to [in, out] layout for the kernel.
    """
    k1, k2, k3, k4 = jax.random.split(key, 4)
    lim1 = 1.0 / jnp.sqrt(in_dim)
    lim2 = 1.0 / jnp.sqrt(hidden)
    w1 = jax.random.uniform(k1, (in_dim, hidden), dtype, -lim1, lim1)
    b1 = jax.random.uniform(k2, (hidden,), dtype, -lim1, lim1)
    w2 = jax.random.uniform(k3, (hidden, out_dim), dtype, -lim2, lim2)
    b2 = jax.random.uniform(k4, (out_dim,), dtype, -lim2, lim2)
    return w1, b1, w2, b2


if __name__ == "__main__":
    # Default MLP config from the PyTorch module.
    IN_DIM, HIDDEN, OUT_DIM = 256, 1024, 52
    B = 8  # small test batch; wrapper pads it up to one 256-row tile

    key = jax.random.PRNGKey(0)
    kx, kp = jax.random.split(key)
    x = jax.random.normal(kx, (B, IN_DIM), jnp.float32)
    w1, b1, w2, b2 = init_params(kp, IN_DIM, HIDDEN, OUT_DIM)

    # One-time param preparation (bf16 cast + out_dim pad) outside hot path.
    params, out_dim = prepare_mlp_params(w1, b1, w2, b2)

    out = mlp_forward(x, params, out_dim=out_dim, block_b=1024)
    out = jax.block_until_ready(out)
    assert out.shape == (B, OUT_DIM)
    assert out.dtype == jnp.float32

    b1r = b1.reshape(1, -1)
    b2r = b2.reshape(1, -1)

    # Reference 1: emulate the bf16-input / f32-accumulate MXU path (tight).
    xb = x.astype(jnp.bfloat16).astype(jnp.float32)
    w1b = w1.astype(jnp.bfloat16).astype(jnp.float32)
    w2b = w2.astype(jnp.bfloat16).astype(jnp.float32)
    h_ref = jnp.maximum(xb @ w1b + b1r, 0.0).astype(jnp.bfloat16).astype(jnp.float32)
    ref_bf16 = h_ref @ w2b + b2r
    assert jnp.allclose(out, ref_bf16, atol=1e-2, rtol=1e-2), "mismatch vs bf16 ref"

    # Reference 2: full fp32 math (loose tolerance for bf16 matmul inputs).
    ref_f32 = jnp.maximum(x @ w1 + b1r, 0.0) @ w2 + b2r
    assert jnp.allclose(out, ref_f32, atol=5e-2, rtol=5e-2), "mismatch vs f32 ref"

    print("KERNEL_OK")
</pallas_src>

<mosaic_0001>
module attributes {stable_mosaic.version = 11 : i64} {
  func.func @_mlp_kernel(%arg0: i32, %arg1: memref<256x256xf32, #tpu.memory_space<vmem>>, %arg2: memref<256x1024xbf16, #tpu.memory_space<vmem>>, %arg3: memref<1x1024xf32, #tpu.memory_space<vmem>>, %arg4: memref<1024x128xbf16, #tpu.memory_space<vmem>>, %arg5: memref<1x128xf32, #tpu.memory_space<vmem>>, %arg6: memref<256x128xf32, #tpu.memory_space<vmem>>) attributes {dimension_semantics = [#tpu.dimension_semantics<parallel>], iteration_bounds = array<i64: 1>, scalar_prefetch = 0 : i64, scratch_operands = 0 : i64, tpu.core_type = #tpu.core_type<tc>, window_params = [{transform_indices = @transform_0, window_bounds = array<i64: 256, 256>}, {pipeline_mode = #tpu.pipeline_mode<synchronous>, transform_indices = @transform_1, window_bounds = array<i64: 256, 1024>}, {pipeline_mode = #tpu.pipeline_mode<synchronous>, transform_indices = @transform_2, window_bounds = array<i64: 1, 1024>}, {pipeline_mode = #tpu.pipeline_mode<synchronous>, transform_indices = @transform_3, window_bounds = array<i64: 1024, 128>}, {pipeline_mode = #tpu.pipeline_mode<synchronous>, transform_indices = @transform_4, window_bounds = array<i64: 1, 128>}, {transform_indices = @transform_5, window_bounds = array<i64: 256, 128>}]} {
    %c0 = arith.constant 0 : index
    %c0_0 = arith.constant 0 : index
    %0 = vector.load %arg1[%c0, %c0_0] : memref<256x256xf32, #tpu.memory_space<vmem>>, vector<256x256xf32>
    %1 = arith.truncf %0 : vector<256x256xf32> to vector<256x256xbf16>
    %c0_1 = arith.constant 0 : index
    %c0_2 = arith.constant 0 : index
    %2 = vector.load %arg2[%c0_1, %c0_2] : memref<256x1024xbf16, #tpu.memory_space<vmem>>, vector<256x1024xbf16>
    %cst = arith.constant dense<0.000000e+00> : vector<256x1024xf32>
    %3 = tpu.matmul %1, %2, %cst {dimension_numbers = #tpu.dot_dimension_numbers<[1], [0], [0], [1], [0, 0, 1, 1], [], []>} : vector<256x256xbf16>, vector<256x1024xbf16>, vector<256x1024xf32> -> vector<256x1024xf32>
    %c0_3 = arith.constant 0 : index
    %c0_4 = arith.constant 0 : index
    %4 = vector.load %arg3[%c0_3, %c0_4] : memref<1x1024xf32, #tpu.memory_space<vmem>>, vector<1x1024xf32>
    %5 = vector.broadcast %4 : vector<1x1024xf32> to vector<256x1024xf32>
    %6 = arith.addf %3, %5 : vector<256x1024xf32>
    %cst_5 = arith.constant 0.000000e+00 : f32
    %7 = vector.broadcast %cst_5 : f32 to vector<256x1024xf32>
    %8 = arith.maximumf %6, %7 : vector<256x1024xf32>
    %9 = arith.truncf %8 : vector<256x1024xf32> to vector<256x1024xbf16>
    %c0_6 = arith.constant 0 : index
    %c0_7 = arith.constant 0 : index
    %10 = vector.load %arg4[%c0_6, %c0_7] : memref<1024x128xbf16, #tpu.memory_space<vmem>>, vector<1024x128xbf16>
    %cst_8 = arith.constant dense<0.000000e+00> : vector<256x128xf32>
    %11 = tpu.matmul %9, %10, %cst_8 {dimension_numbers = #tpu.dot_dimension_numbers<[1], [0], [0], [1], [0, 0, 1, 1], [], []>} : vector<256x1024xbf16>, vector<1024x128xbf16>, vector<256x128xf32> -> vector<256x128xf32>
    %c0_9 = arith.constant 0 : index
    %c0_10 = arith.constant 0 : index
    %12 = vector.load %arg5[%c0_9, %c0_10] : memref<1x128xf32, #tpu.memory_space<vmem>>, vector<1x128xf32>
    %13 = vector.broadcast %12 : vector<1x128xf32> to vector<256x128xf32>
    %14 = arith.addf %11, %13 : vector<256x128xf32>
    %c0_11 = arith.constant 0 : index
    %c0_12 = arith.constant 0 : index
    %15 = vector.load %arg6[%c0_11, %c0_12] : memref<256x128xf32, #tpu.memory_space<vmem>>, vector<256x128xf32>
    tpu.vector_store %arg6[%c0_11, %c0_12], %14 {strides = array<i32>} : memref<256x128xf32, #tpu.memory_space<vmem>>, vector<256x128xf32>,
    return
  }
  func.func @transform_0(%arg0: i32) -> (i32, i32) {
    %c0_i32 = arith.constant 0 : i32
    %c0_i32_0 = arith.constant 0 : i32
    return %arg0, %c0_i32 : i32, i32
  }
  func.func @transform_1(%arg0: i32) -> (i32, i32) {
    %c0_i32 = arith.constant 0 : i32
    %c0_i32_0 = arith.constant 0 : i32
    %c0_i32_1 = arith.constant 0 : i32
    return %c0_i32, %c0_i32_0 : i32, i32
  }
  func.func @transform_2(%arg0: i32) -> (i32, i32) {
    %c0_i32 = arith.constant 0 : i32
    %c0_i32_0 = arith.constant 0 : i32
    %c0_i32_1 = arith.constant 0 : i32
    return %c0_i32, %c0_i32_0 : i32, i32
  }
  func.func @transform_3(%arg0: i32) -> (i32, i32) {
    %c0_i32 = arith.constant 0 : i32
    %c0_i32_0 = arith.constant 0 : i32
    %c0_i32_1 = arith.constant 0 : i32
    return %c0_i32, %c0_i32_0 : i32, i32
  }
  func.func @transform_4(%arg0: i32) -> (i32, i32) {
    %c0_i32 = arith.constant 0 : i32
    %c0_i32_0 = arith.constant 0 : i32
    %c0_i32_1 = arith.constant 0 : i32
    return %c0_i32, %c0_i32_0 : i32, i32
  }
  func.func @transform_5(%arg0: i32) -> (i32, i32) {
    %c0_i32 = arith.constant 0 : i32
    %c0_i32_0 = arith.constant 0 : i32
    return %arg0, %c0_i32 : i32, i32
  }
}

</mosaic_0001>

<llo_original>
// kernel: mlp_forward.1
$region0: #{mlp_forward.1}
  #allocation0 [shape = 'u32[]', space=smem, size = 0x4, offset = 0x4, fixed_abs, tag = 'smem constant byte address 0x4 - core index']
  #allocation1 [shape = 'u32[144,128]{1,0:T(1,128)}', space=vmem, size = 0x12000, scoped, tag = 'internal scratch']
  %s0 = inlined_call_operand.vmem [shape: f32[256,256], index: 0, kind: input, shape index: {}]
  %s1 = inlined_call_operand.hbm [shape: bf16[256,1024], index: 1, kind: input, shape index: {}]
  %s2 = inlined_call_operand.vmem [shape: f32[1,1024], index: 2, kind: input, shape index: {}]
  %s3 = inlined_call_operand.vmem [shape: bf16[1024,128], index: 3, kind: input, shape index: {}]
  %s4 = inlined_call_operand.vmem [shape: f32[1,128], index: 4, kind: input, shape index: {}]
  %s5 = inlined_call_operand.vmem [shape: f32[256,128], index: 5, kind: output, shape index: {}]
  %s6 = sld [smem:[#allocation0]]
  $region34: #{mlp_forward.1} parent=0
    _
  %s8 = ssub.s32 1, %s6
  %s9 = scalar_select 0, %s8, %s6
  $region1: #{mlp_forward.1} parent=0
    #allocation2 [shape = 'u8[524288]{0}', space=vmem, size = 0x80000, scoped, tag = 'input window, operand 1, single buffered']
    #allocation3 [shape = 's32[1]{0}', space=sflag, size = 0x4, scoped, tag = 'scoped memory for mlp_forward.1']
    %10 = vsyncpa [#allocation3], 0
    // Predicated region
    $region2: #{mlp_forward.1} parent=1 // pred_check
      _
    $region3: #{mlp_forward.1} parent=1 // pred_check_branch
      %12 = sbr.rel (0) target = $region5
    $region4: #{mlp_forward.1} parent=1 // pred_region
      _
    $region5: #{mlp_forward.1} parent=1 // pred_fallthru
      _
    // Predicated region
    $region6: #{mlp_forward.1} parent=1 // pred_check
      _
    $region7: #{mlp_forward.1} parent=1 // pred_check_branch
      %14 = sbr.rel (0) target = $region9
    $region8: #{mlp_forward.1} parent=1 // pred_region
      %s16 = ssub.s32 16384, 16384
      %17 = vsyncadd [#allocation3], %s16
      %s18 = sshll.u32 [#allocation2], 4
      %s19 = int_to_ptr.vmem [resolvable:$true] %s18
      %24 = dma.hbm_to_vmem [thread:$0]  %s1, 16384, %s19, [#allocation3], 512, 512, 32
    $region9: #{mlp_forward.1} parent=1 // pred_fallthru
      _
    // Predicated region
    $region10: #{mlp_forward.1} parent=1 // pred_check
      _
    $region11: #{mlp_forward.1} parent=1 // pred_check_branch
      %26 = sbr.rel (0) target = $region13
    $region12: #{mlp_forward.1} parent=1 // pred_region
      _
    $region13: #{mlp_forward.1} parent=1 // pred_fallthru
      _
    // Predicated region
    $region14: #{mlp_forward.1} parent=1 // pred_check
      _
    $region15: #{mlp_forward.1} parent=1 // pred_check_branch
      %28 = sbr.rel (0) target = $region17
    $region16: #{mlp_forward.1} parent=1 // pred_region
      _
    $region17: #{mlp_forward.1} parent=1 // pred_fallthru
      _
    // Predicated region
    $region18: #{mlp_forward.1} parent=1 // pred_check
      _
    $region19: #{mlp_forward.1} parent=1 // pred_check_branch
      %30 = sbr.rel (0) target = $region21
    $region20: #{mlp_forward.1} parent=1 // pred_region
      _
    $region21: #{mlp_forward.1} parent=1 // pred_fallthru
      _
    // Predicated region
    $region22: #{mlp_forward.1} parent=1 // pred_check
      _
    $region23: #{mlp_forward.1} parent=1 // pred_check_branch
      %32 = sbr.rel (0) target = $region25
    $region24: #{mlp_forward.1} parent=1 // pred_region
      %33 = dma.done [#allocation3], 16384
    $region25: #{mlp_forward.1} parent=1 // pred_fallthru
      _
    %v35 = vld [vmem:[%s0] sm:$0xff]
    %v36 = vld [vmem:[%s0 + $0x8] sm:$0xff]
    %v37 = vld [vmem:[%s0 + $0x10] sm:$0xff]
    %v38 = vld [vmem:[%s0 + $0x18] sm:$0xff]
    %v39 = vld [vmem:[%s0 + $0x20] sm:$0xff]
    %v40 = vld [vmem:[%s0 + $0x28] sm:$0xff]
    %v41 = vld [vmem:[%s0 + $0x30] sm:$0xff]
    %v42 = vld [vmem:[%s0 + $0x38] sm:$0xff]
    %v43 = vld [vmem:[%s0 + $0x40] sm:$0xff]
    %v44 = vld [vmem:[%s0 + $0x48] sm:$0xff]
    %v45 = vld [vmem:[%s0 + $0x50] sm:$0xff]
    %v46 = vld [vmem:[%s0 + $0x58] sm:$0xff]
    %v47 = vld [vmem:[%s0 + $0x60] sm:$0xff]
    %v48 = vld [vmem:[%s0 + $0x68] sm:$0xff]
    %v49 = vld [vmem:[%s0 + $0x70] sm:$0xff]
    %v50 = vld [vmem:[%s0 + $0x78] sm:$0xff]
    %v51 = vld [vmem:[%s0 + $0x80] sm:$0xff]
    %v52 = vld [vmem:[%s0 + $0x88] sm:$0xff]
    %v53 = vld [vmem:[%s0 + $0x90] sm:$0xff]
    %v54 = vld [vmem:[%s0 + $0x98] sm:$0xff]
    %v55 = vld [vmem:[%s0 + $0xa0] sm:$0xff]
    %v56 = vld [vmem:[%s0 + $0xa8] sm:$0xff]
    %v57 = vld [vmem:[%s0 + $0xb0] sm:$0xff]
    %v58 = vld [vmem:[%s0 + $0xb8] sm:$0xff]
    %v59 = vld [vmem:[%s0 + $0xc0] sm:$0xff]
    %v60 = vld [vmem:[%s0 + $0xc8] sm:$0xff]
    %v61 = vld [vmem:[%s0 + $0xd0] sm:$0xff]
    %v62 = vld [vmem:[%s0 + $0xd8] sm:$0xff]
    %v63 = vld [vmem:[%s0 + $0xe0] sm:$0xff]
    %v64 = vld [vmem:[%s0 + $0xe8] sm:$0xff]
    %v65 = vld [vmem:[%s0 + $0xf0] sm:$0xff]
    %v66 = vld [vmem:[%s0 + $0xf8] sm:$0xff]
    %v67 = vld [vmem:[%s0 + $0x100] sm:$0xff]
    %v68 = vld [vmem:[%s0 + $0x108] sm:$0xff]
    %v69 = vld [vmem:[%s0 + $0x110] sm:$0xff]
    %v70 = vld [vmem:[%s0 + $0x118] sm:$0xff]
    %v71 = vld [vmem:[%s0 + $0x120] sm:$0xff]
    %v72 = vld [vmem:[%s0 + $0x128] sm:$0xff]
    %v73 = vld [vmem:[%s0 + $0x130] sm:$0xff]
    %v74 = vld [vmem:[%s0 + $0x138] sm:$0xff]
    %v75 = vld [vmem:[%s0 + $0x140] sm:$0xff]
    %v76 = vld [vmem:[%s0 + $0x148] sm:$0xff]
    %v77 = vld [vmem:[%s0 + $0x150] sm:$0xff]
    %v78 = vld [vmem:[%s0 + $0x158] sm:$0xff]
    %v79 = vld [vmem:[%s0 + $0x160] sm:$0xff]
    %v80 = vld [vmem:[%s0 + $0x168] sm:$0xff]
    %v81 = vld [vmem:[%s0 + $0x170] sm:$0xff]
    %v82 = vld [vmem:[%s0 + $0x178] sm:$0xff]
    %v83 = vld [vmem:[%s0 + $0x180] sm:$0xff]
    %v84 = vld [vmem:[%s0 + $0x188] sm:$0xff]
    %v85 = vld [vmem:[%s0 + $0x190] sm:$0xff]
    %v86 = vld [vmem:[%s0 + $0x198] sm:$0xff]
    %v87 = vld [vmem:[%s0 + $0x1a0] sm:$0xff]
    %v88 = vld [vmem:[%s0 + $0x1a8] sm:$0xff]
    %v89 = vld [vmem:[%s0 + $0x1b0] sm:$0xff]
    %v90 = vld [vmem:[%s0 + $0x1b8] sm:$0xff]
    %v91 = vld [vmem:[%s0 + $0x1c0] sm:$0xff]
    %v92 = vld [vmem:[%s0 + $0x1c8] sm:$0xff]
    %v93 = vld [vmem:[%s0 + $0x1d0] sm:$0xff]
    %v94 = vld [vmem:[%s0 + $0x1d8] sm:$0xff]
    %v95 = vld [vmem:[%s0 + $0x1e0] sm:$0xff]
    %v96 = vld [vmem:[%s0 + $0x1e8] sm:$0xff]
    %v97 = vld [vmem:[%s0 + $0x1f0] sm:$0xff]
    %v98 = vld [vmem:[%s0 + $0x1f8] sm:$0xff]
    %v99 = vpack.c.bf16 %v37, %v35
    %v100 = vpack.c.bf16 %v38, %v36
    %v101 = vpack.c.bf16 %v41, %v39
    %v102 = vpack.c.bf16 %v42, %v40
    %v103 = vpack.c.bf16 %v45, %v43
    %v104 = vpack.c.bf16 %v46, %v44
    %v105 = vpack.c.bf16 %v49, %v47
    %v106 = vpack.c.bf16 %v50, %v48
    %v107 = vpack.c.bf16 %v53, %v51
    %v108 = vpack.c.bf16 %v54, %v52
    %v109 = vpack.c.bf16 %v57, %v55
    %v110 = vpack.c.bf16 %v58, %v56
    %v111 = vpack.c.bf16 %v61, %v59
    %v112 = vpack.c.bf16 %v62, %v60
    %v113 = vpack.c.bf16 %v65, %v63
    %v114 = vpack.c.bf16 %v66, %v64
    %v115 = vpack.c.bf16 %v69, %v67
    %v116 = vpack.c.bf16 %v70, %v68
    %v117 = vpack.c.bf16 %v73, %v71
    %v118 = vpack.c.bf16 %v74, %v72
    %v119 = vpack.c.bf16 %v77, %v75
    %v120 = vpack.c.bf16 %v78, %v76
    %v121 = vpack.c.bf16 %v81, %v79
    %v122 = vpack.c.bf16 %v82, %v80
    %v123 = vpack.c.bf16 %v85, %v83
    %v124 = vpack.c.bf16 %v86, %v84
    %v125 = vpack.c.bf16 %v89, %v87
    %v126 = vpack.c.bf16 %v90, %v88
    %v127 = vpack.c.bf16 %v93, %v91
    %v128 = vpack.c.bf16 %v94, %v92
    %v129 = vpack.c.bf16 %v97, %v95
    %v130 = vpack.c.bf16 %v98, %v96
    %v131 = vld [vmem:[#allocation2] sm:$0xff]
    %v132 = vld [vmem:[#allocation2 + $0x8] sm:$0xff]
    %v133 = vld [vmem:[#allocation2 + $0x10] sm:$0xff]
    %v134 = vld [vmem:[#allocation2 + $0x18] sm:$0xff]
    %v135 = vld [vmem:[#allocation2 + $0x20] sm:$0xff]
    %v136 = vld [vmem:[#allocation2 + $0x28] sm:$0xff]
    %v137 = vld [vmem:[#allocation2 + $0x30] sm:$0xff]
    %v138 = vld [vmem:[#allocation2 + $0x38] sm:$0xff]
    %v139 = vld [vmem:[#allocation2 + $0x40] sm:$0xff]
    %v140 = vld [vmem:[#allocation2 + $0x48] sm:$0xff]
    %v141 = vld [vmem:[#allocation2 + $0x50] sm:$0xff]
    %v142 = vld [vmem:[#allocation2 + $0x58] sm:$0xff]
    %v143 = vld [vmem:[#allocation2 + $0x60] sm:$0xff]
    %v144 = vld [vmem:[#allocation2 + $0x68] sm:$0xff]
    %v145 = vld [vmem:[#allocation2 + $0x70] sm:$0xff]
    %v146 = vld [vmem:[#allocation2 + $0x78] sm:$0xff]
    %v147 = vld [vmem:[#allocation2 + $0x80] sm:$0xff]
    %v148 = vld [vmem:[#allocation2 + $0x88] sm:$0xff]
    %v149 = vld [vmem:[#allocation2 + $0x90] sm:$0xff]
    %v150 = vld [vmem:[#allocation2 + $0x98] sm:$0xff]
    %v151 = vld [vmem:[#allocation2 + $0xa0] sm:$0xff]
    %v152 = vld [vmem:[#allocation2 + $0xa8] sm:$0xff]
    %v153 = vld [vmem:[#allocation2 + $0xb0] sm:$0xff]
    %v154 = vld [vmem:[#allocation2 + $0xb8] sm:$0xff]
    %v155 = vld [vmem:[#allocation2 + $0xc0] sm:$0xff]
    %v156 = vld [vmem:[#allocation2 + $0xc8] sm:$0xff]
    %v157 = vld [vmem:[#allocation2 + $0xd0] sm:$0xff]
    %v158 = vld [vmem:[#allocation2 + $0xd8] sm:$0xff]
    %v159 = vld [vmem:[#allocation2 + $0xe0] sm:$0xff]
    %v160 = vld [vmem:[#allocation2 + $0xe8] sm:$0xff]
    %v161 = vld [vmem:[#allocation2 + $0xf0] sm:$0xff]
    %v162 = vld [vmem:[#allocation2 + $0xf8] sm:$0xff]
    %v163 = vld [vmem:[#allocation2 + $0x100] sm:$0xff]
    %v164 = vld [vmem:[#allocation2 + $0x108] sm:$0xff]
    %v165 = vld [vmem:[#allocation2 + $0x110] sm:$0xff]
    %v166 = vld [vmem:[#allocation2 + $0x118] sm:$0xff]
    %v167 = vld [vmem:[#allocation2 + $0x120] sm:$0xff]
    %v168 = vld [vmem:[#allocation2 + $0x128] sm:$0xff]
    %v169 = vld [vmem:[#allocation2 + $0x130] sm:$0xff]
    %v170 = vld [vmem:[#allocation2 + $0x138] sm:$0xff]
    %v171 = vld [vmem:[#allocation2 + $0x140] sm:$0xff]
    %v172 = vld [vmem:[#allocation2 + $0x148] sm:$0xff]
    %v173 = vld [vmem:[#allocation2 + $0x150] sm:$0xff]
    %v174 = vld [vmem:[#allocation2 + $0x158] sm:$0xff]
    %v175 = vld [vmem:[#allocation2 + $0x160] sm:$0xff]
    %v176 = vld [vmem:[#allocation2 + $0x168] sm:$0xff]
    %v177 = vld [vmem:[#allocation2 + $0x170] sm:$0xff]
    %v178 = vld [vmem:[#allocation2 + $0x178] sm:$0xff]
    %v179 = vld [vmem:[#allocation2 + $0x180] sm:$0xff]
    %v180 = vld [vmem:[#allocation2 + $0x188] sm:$0xff]
    %v181 = vld [vmem:[#allocation2 + $0x190] sm:$0xff]
    %v182 = vld [vmem:[#allocation2 + $0x198] sm:$0xff]
    %v183 = vld [vmem:[#allocation2 + $0x1a0] sm:$0xff]
    %v184 = vld [vmem:[#allocation2 + $0x1a8] sm:$0xff]
    %v185 = vld [vmem:[#allocation2 + $0x1b0] sm:$0xff]
    %v186 = vld [vmem:[#allocation2 + $0x1b8] sm:$0xff]
    %v187 = vld [vmem:[#allocation2 + $0x1c0] sm:$0xff]
    %v188 = vld [vmem:[#allocation2 + $0x1c8] sm:$0xff]
    %v189 = vld [vmem:[#allocation2 + $0x1d0] sm:$0xff]
    %v190 = vld [vmem:[#allocation2 + $0x1d8] sm:$0xff]
    %v191 = vld [vmem:[#allocation2 + $0x1e0] sm:$0xff]
    %v192 = vld [vmem:[#allocation2 + $0x1e8] sm:$0xff]
    %v193 = vld [vmem:[#allocation2 + $0x1f0] sm:$0xff]
    %v194 = vld [vmem:[#allocation2 + $0x1f8] sm:$0xff]
    %v195 = vld [vmem:[#allocation2 + $0x200] sm:$0xff]
    %v196 = vld [vmem:[#allocation2 + $0x208] sm:$0xff]
    %v197 = vld [vmem:[#allocation2 + $0x210] sm:$0xff]
    %v198 = vld [vmem:[#allocation2 + $0x218] sm:$0xff]
    %v199 = vld [vmem:[#allocation2 + $0x220] sm:$0xff]
    %v200 = vld [vmem:[#allocation2 + $0x228] sm:$0xff]
    %v201 = vld [vmem:[#allocation2 + $0x230] sm:$0xff]
    %v202 = vld [vmem:[#allocation2 + $0x238] sm:$0xff]
    %v203 = vld [vmem:[#allocation2 + $0x240] sm:$0xff]
    %v204 = vld [vmem:[#allocation2 + $0x248] sm:$0xff]
    %v205 = vld [vmem:[#allocation2 + $0x250] sm:$0xff]
    %v206 = vld [vmem:[#allocation2 + $0x258] sm:$0xff]
    %v207 = vld [vmem:[#allocation2 + $0x260] sm:$0xff]
    %v208 = vld [vmem:[#allocation2 + $0x268] sm:$0xff]
    %v209 = vld [vmem:[#allocation2 + $0x270] sm:$0xff]
    %v210 = vld [vmem:[#allocation2 + $0x278] sm:$0xff]
    %v211 = vld [vmem:[#allocation2 + $0x280] sm:$0xff]
    %v212 = vld [vmem:[#allocation2 + $0x288] sm:$0xff]
    %v213 = vld [vmem:[#allocation2 + $0x290] sm:$0xff]
    %v214 = vld [vmem:[#allocation2 + $0x298] sm:$0xff]
    %v215 = vld [vmem:[#allocation2 + $0x2a0] sm:$0xff]
    %v216 = vld [vmem:[#allocation2 + $0x2a8] sm:$0xff]
    %v217 = vld [vmem:[#allocation2 + $0x2b0] sm:$0xff]
    %v218 = vld [vmem:[#allocation2 + $0x2b8] sm:$0xff]
    %v219 = vld [vmem:[#allocation2 + $0x2c0] sm:$0xff]
    %v220 = vld [vmem:[#allocation2 + $0x2c8] sm:$0xff]
    %v221 = vld [vmem:[#allocation2 + $0x2d0] sm:$0xff]
    %v222 = vld [vmem:[#allocation2 + $0x2d8] sm:$0xff]
    %v223 = vld [vmem:[#allocation2 + $0x2e0] sm:$0xff]
    %v224 = vld [vmem:[#allocation2 + $0x2e8] sm:$0xff]
    %v225 = vld [vmem:[#allocation2 + $0x2f0] sm:$0xff]
    %v226 = vld [vmem:[#allocation2 + $0x2f8] sm:$0xff]
    %v227 = vld [vmem:[#allocation2 + $0x300] sm:$0xff]
    %v228 = vld [vmem:[#allocation2 + $0x308] sm:$0xff]
    %v229 = vld [vmem:[#allocation2 + $0x310] sm:$0xff]
    %v230 = vld [vmem:[#allocation2 + $0x318] sm:$0xff]
    %v231 = vld [vmem:[#allocation2 + $0x320] sm:$0xff]
    %v232 = vld [vmem:[#allocation2 + $0x328] sm:$0xff]
    %v233 = vld [vmem:[#allocation2 + $0x330] sm:$0xff]
    %v234 = vld [vmem:[#allocation2 + $0x338] sm:$0xff]
    %v235 = vld [vmem:[#allocation2 + $0x340] sm:$0xff]
    %v236 = vld [vmem:[#allocation2 + $0x348] sm:$0xff]
    %v237 = vld [vmem:[#allocation2 + $0x350] sm:$0xff]
    %v238 = vld [vmem:[#allocation2 + $0x358] sm:$0xff]
    %v239 = vld [vmem:[#allocation2 + $0x360] sm:$0xff]
    %v240 = vld [vmem:[#allocation2 + $0x368] sm:$0xff]
    %v241 = vld [vmem:[#allocation2 + $0x370] sm:$0xff]
    %v242 = vld [vmem:[#allocation2 + $0x378] sm:$0xff]
    %v243 = vld [vmem:[#allocation2 + $0x380] sm:$0xff]
    %v244 = vld [vmem:[#allocation2 + $0x388] sm:$0xff]
    %v245 = vld [vmem:[#allocation2 + $0x390] sm:$0xff]
    %v246 = vld [vmem:[#allocation2 + $0x398] sm:$0xff]
    %v247 = vld [vmem:[#allocation2 + $0x3a0] sm:$0xff]
    %v248 = vld [vmem:[#allocation2 + $0x3a8] sm:$0xff]
    %v249 = vld [vmem:[#allocation2 + $0x3b0] sm:$0xff]
    %v250 = vld [vmem:[#allocation2 + $0x3b8] sm:$0xff]
    %v251 = vld [vmem:[#allocation2 + $0x3c0] sm:$0xff]
    %v252 = vld [vmem:[#allocation2 + $0x3c8] sm:$0xff]
    %v253 = vld [vmem:[#allocation2 + $0x3d0] sm:$0xff]
    %v254 = vld [vmem:[#allocation2 + $0x3d8] sm:$0xff]
    %v255 = vld [vmem:[#allocation2 + $0x3e0] sm:$0xff]
    %v256 = vld [vmem:[#allocation2 + $0x3e8] sm:$0xff]
    %v257 = vld [vmem:[#allocation2 + $0x3f0] sm:$0xff]
    %v258 = vld [vmem:[#allocation2 + $0x3f8] sm:$0xff]
    %v259 = vld [vmem:[%s2] sm:$0xff]
    %v261 = vlaneseq
    %v262 = vshrl.u32 %v261, 7
    %v263 = vsub.s32 0, %v262
    %v264 = vrot.slane %v259, %v263
    %v265 = vlaneseq
    %v266 = vshrl.u32 %v265, 7
    %v267 = vsub.s32 1, %v266
    %v268 = vrot.slane %v259, %v267
    %v269 = vlaneseq
    %v270 = vshrl.u32 %v269, 7
    %v271 = vsub.s32 2, %v270
    %v272 = vrot.slane %v259, %v271
    %v273 = vlaneseq
    %v274 = vshrl.u32 %v273, 7
    %v275 = vsub.s32 3, %v274
    %v276 = vrot.slane %v259, %v275
    %v277 = vlaneseq
    %v278 = vshrl.u32 %v277, 7
    %v279 = vsub.s32 4, %v278
    %v280 = vrot.slane %v259, %v279
    %v281 = vlaneseq
    %v282 = vshrl.u32 %v281, 7
    %v283 = vsub.s32 5, %v282
    %v284 = vrot.slane %v259, %v283
    %v285 = vlaneseq
    %v286 = vshrl.u32 %v285, 7
    %v287 = vsub.s32 6, %v286
    %v288 = vrot.slane %v259, %v287
    %v289 = vlaneseq
    %v290 = vshrl.u32 %v289, 7
    %v291 = vsub.s32 7, %v290
    %v292 = vrot.slane %v259, %v291
    %v429 = vunpack.c.l.b16 %v131
    %v430 = vunpack.c.h.b16 %v131
    %v431 = vunpack.c.l.b16 %v132
    %v432 = vunpack.c.h.b16 %v132
    %v433 = vunpack.c.l.b16 %v133
    %v434 = vunpack.c.h.b16 %v133
    %v435 = vunpack.c.l.b16 %v134
    %v436 = vunpack.c.h.b16 %v134
    %v437 = vunpack.c.l.b16 %v135
    %v438 = vunpack.c.h.b16 %v135
    %v439 = vunpack.c.l.b16 %v136
    %v440 = vunpack.c.h.b16 %v136
    %v441 = vunpack.c.l.b16 %v137
    %v442 = vunpack.c.h.b16 %v137
    %v443 = vunpack.c.l.b16 %v138
    %v444 = vunpack.c.h.b16 %v138
    %v445 = vunpack.c.l.b16 %v139
    %v446 = vunpack.c.h.b16 %v139
    %v447 = vunpack.c.l.b16 %v140
    %v448 = vunpack.c.h.b16 %v140
    %v449 = vunpack.c.l.b16 %v141
    %v450 = vunpack.c.h.b16 %v141
    %v451 = vunpack.c.l.b16 %v142
    %v452 = vunpack.c.h.b16 %v142
    %v453 = vunpack.c.l.b16 %v143
    %v454 = vunpack.c.h.b16 %v143
    %v455 = vunpack.c.l.b16 %v144
    %v456 = vunpack.c.h.b16 %v144
    %v457 = vunpack.c.l.b16 %v145
    %v458 = vunpack.c.h.b16 %v145
    %v459 = vunpack.c.l.b16 %v146
    %v460 = vunpack.c.h.b16 %v146
    %v461 = vunpack.c.l.b16 %v147
    %v462 = vunpack.c.h.b16 %v147
    %v463 = vunpack.c.l.b16 %v148
    %v464 = vunpack.c.h.b16 %v148
    %v465 = vunpack.c.l.b16 %v149
    %v466 = vunpack.c.h.b16 %v149
    %v467 = vunpack.c.l.b16 %v150
    %v468 = vunpack.c.h.b16 %v150
    %v469 = vunpack.c.l.b16 %v151
    %v470 = vunpack.c.h.b16 %v151
    %v471 = vunpack.c.l.b16 %v152
    %v472 = vunpack.c.h.b16 %v152
    %v473 = vunpack.c.l.b16 %v153
    %v474 = vunpack.c.h.b16 %v153
    %v475 = vunpack.c.l.b16 %v154
    %v476 = vunpack.c.h.b16 %v154
    %v477 = vunpack.c.l.b16 %v155
    %v478 = vunpack.c.h.b16 %v155
    %v479 = vunpack.c.l.b16 %v156
    %v480 = vunpack.c.h.b16 %v156
    %v481 = vunpack.c.l.b16 %v157
    %v482 = vunpack.c.h.b16 %v157
    %v483 = vunpack.c.l.b16 %v158
    %v484 = vunpack.c.h.b16 %v158
    %v485 = vunpack.c.l.b16 %v159
    %v486 = vunpack.c.h.b16 %v159
    %v487 = vunpack.c.l.b16 %v160
    %v488 = vunpack.c.h.b16 %v160
    %v489 = vunpack.c.l.b16 %v161
    %v490 = vunpack.c.h.b16 %v161
    %v491 = vunpack.c.l.b16 %v162
    %v492 = vunpack.c.h.b16 %v162
    %v493 = vunpack.c.l.b16 %v163
    %v494 = vunpack.c.h.b16 %v163
    %v495 = vunpack.c.l.b16 %v164
    %v496 = vunpack.c.h.b16 %v164
    %v497 = vunpack.c.l.b16 %v165
    %v498 = vunpack.c.h.b16 %v165
    %v499 = vunpack.c.l.b16 %v166
    %v500 = vunpack.c.h.b16 %v166
    %v501 = vunpack.c.l.b16 %v167
    %v502 = vunpack.c.h.b16 %v167
    %v503 = vunpack.c.l.b16 %v168
    %v504 = vunpack.c.h.b16 %v168
    %v505 = vunpack.c.l.b16 %v169
    %v506 = vunpack.c.h.b16 %v169
    %v507 = vunpack.c.l.b16 %v170
    %v508 = vunpack.c.h.b16 %v170
    %v509 = vunpack.c.l.b16 %v171
    %v510 = vunpack.c.h.b16 %v171
    %v511 = vunpack.c.l.b16 %v172
    %v512 = vunpack.c.h.b16 %v172
    %v513 = vunpack.c.l.b16 %v173
    %v514 = vunpack.c.h.b16 %v173
    %v515 = vunpack.c.l.b16 %v174
    %v516 = vunpack.c.h.b16 %v174
    %v517 = vunpack.c.l.b16 %v175
    %v518 = vunpack.c.h.b16 %v175
    %v519 = vunpack.c.l.b16 %v176
    %v520 = vunpack.c.h.b16 %v176
    %v521 = vunpack.c.l.b16 %v177
    %v522 = vunpack.c.h.b16 %v177
    %v523 = vunpack.c.l.b16 %v178
    %v524 = vunpack.c.h.b16 %v178
    %v525 = vunpack.c.l.b16 %v179
    %v526 = vunpack.c.h.b16 %v179
    %v527 = vunpack.c.l.b16 %v180
    %v528 = vunpack.c.h.b16 %v180
    %v529 = vunpack.c.l.b16 %v181
    %v530 = vunpack.c.h.b16 %v181
    %v531 = vunpack.c.l.b16 %v182
    %v532 = vunpack.c.h.b16 %v182
    %v533 = vunpack.c.l.b16 %v183
    %v534 = vunpack.c.h.b16 %v183
    %v535 = vunpack.c.l.b16 %v184
    %v536 = vunpack.c.h.b16 %v184
    %v537 = vunpack.c.l.b16 %v185
    %v538 = vunpack.c.h.b16 %v185
    %v539 = vunpack.c.l.b16 %v186
    %v540 = vunpack.c.h.b16 %v186
    %v541 = vunpack.c.l.b16 %v187
    %v542 = vunpack.c.h.b16 %v187
    %v543 = vunpack.c.l.b16 %v188
    %v544 = vunpack.c.h.b16 %v188
    %v545 = vunpack.c.l.b16 %v189
    %v546 = vunpack.c.h.b16 %v189
    %v547 = vunpack.c.l.b16 %v190
    %v548 = vunpack.c.h.b16 %v190
    %v549 = vunpack.c.l.b16 %v191
    %v550 = vunpack.c.h.b16 %v191
    %v551 = vunpack.c.l.b16 %v192
    %v552 = vunpack.c.h.b16 %v192
    %v553 = vunpack.c.l.b16 %v193
    %v554 = vunpack.c.h.b16 %v193
    %v555 = vunpack.c.l.b16 %v194
    %v556 = vunpack.c.h.b16 %v194
    %v557 = vunpack.c.l.b16 %v195
    %v558 = vunpack.c.h.b16 %v195
    %v559 = vunpack.c.l.b16 %v196
    %v560 = vunpack.c.h.b16 %v196
    %v561 = vunpack.c.l.b16 %v197
    %v562 = vunpack.c.h.b16 %v197
    %v563 = vunpack.c.l.b16 %v198
    %v564 = vunpack.c.h.b16 %v198
    %v565 = vunpack.c.l.b16 %v199
    %v566 = vunpack.c.h.b16 %v199
    %v567 = vunpack.c.l.b16 %v200
    %v568 = vunpack.c.h.b16 %v200
    %v569 = vunpack.c.l.b16 %v201
    %v570 = vunpack.c.h.b16 %v201
    %v571 = vunpack.c.l.b16 %v202
    %v572 = vunpack.c.h.b16 %v202
    %v573 = vunpack.c.l.b16 %v203
    %v574 = vunpack.c.h.b16 %v203
    %v575 = vunpack.c.l.b16 %v204
    %v576 = vunpack.c.h.b16 %v204
    %v577 = vunpack.c.l.b16 %v205
    %v578 = vunpack.c.h.b16 %v205
    %v579 = vunpack.c.l.b16 %v206
    %v580 = vunpack.c.h.b16 %v206
    %v581 = vunpack.c.l.b16 %v207
    %v582 = vunpack.c.h.b16 %v207
    %v583 = vunpack.c.l.b16 %v208
    %v584 = vunpack.c.h.b16 %v208
    %v585 = vunpack.c.l.b16 %v209
    %v586 = vunpack.c.h.b16 %v209
    %v587 = vunpack.c.l.b16 %v210
    %v588 = vunpack.c.h.b16 %v210
    %v589 = vunpack.c.l.b16 %v211
    %v590 = vunpack.c.h.b16 %v211
    %v591 = vunpack.c.l.b16 %v212
    %v592 = vunpack.c.h.b16 %v212
    %v593 = vunpack.c.l.b16 %v213
    %v594 = vunpack.c.h.b16 %v213
    %v595 = vunpack.c.l.b16 %v214
    %v596 = vunpack.c.h.b16 %v214
    %v597 = vunpack.c.l.b16 %v215
    %v598 = vunpack.c.h.b16 %v215
    %v599 = vunpack.c.l.b16 %v216
    %v600 = vunpack.c.h.b16 %v216
    %v601 = vunpack.c.l.b16 %v217
    %v602 = vunpack.c.h.b16 %v217
    %v603 = vunpack.c.l.b16 %v218
    %v604 = vunpack.c.h.b16 %v218
    %v605 = vunpack.c.l.b16 %v219
    %v606 = vunpack.c.h.b16 %v219
    %v607 = vunpack.c.l.b16 %v220
    %v608 = vunpack.c.h.b16 %v220
    %v609 = vunpack.c.l.b16 %v221
    %v610 = vunpack.c.h.b16 %v221
    %v611 = vunpack.c.l.b16 %v222
    %v612 = vunpack.c.h.b16 %v222
    %v613 = vunpack.c.l.b16 %v223
    %v614 = vunpack.c.h.b16 %v223
    %v615 = vunpack.c.l.b16 %v224
    %v616 = vunpack.c.h.b16 %v224
    %v617 = vunpack.c.l.b16 %v225
    %v618 = vunpack.c.h.b16 %v225
    %v619 = vunpack.c.l.b16 %v226
    %v620 = vunpack.c.h.b16 %v226
    %v621 = vunpack.c.l.b16 %v227
    %v622 = vunpack.c.h.b16 %v227
    %v623 = vunpack.c.l.b16 %v228
    %v624 = vunpack.c.h.b16 %v228
    %v625 = vunpack.c.l.b16 %v229
    %v626 = vunpack.c.h.b16 %v229
    %v627 = vunpack.c.l.b16 %v230
    %v628 = vunpack.c.h.b16 %v230
    %v629 = vunpack.c.l.b16 %v231
    %v630 = vunpack.c.h.b16 %v231
    %v631 = vunpack.c.l.b16 %v232
    %v632 = vunpack.c.h.b16 %v232
    %v633 = vunpack.c.l.b16 %v233
    %v634 = vunpack.c.h.b16 %v233
    %v635 = vunpack.c.l.b16 %v234
    %v636 = vunpack.c.h.b16 %v234
    %v637 = vunpack.c.l.b16 %v235
    %v638 = vunpack.c.h.b16 %v235
    %v639 = vunpack.c.l.b16 %v236
    %v640 = vunpack.c.h.b16 %v236
    %v641 = vunpack.c.l.b16 %v237
    %v642 = vunpack.c.h.b16 %v237
    %v643 = vunpack.c.l.b16 %v238
    %v644 = vunpack.c.h.b16 %v238
    %v645 = vunpack.c.l.b16 %v239
    %v646 = vunpack.c.h.b16 %v239
    %v647 = vunpack.c.l.b16 %v240
    %v648 = vunpack.c.h.b16 %v240
    %v649 = vunpack.c.l.b16 %v241
    %v650 = vunpack.c.h.b16 %v241
    %v651 = vunpack.c.l.b16 %v242
    %v652 = vunpack.c.h.b16 %v242
    %v653 = vunpack.c.l.b16 %v243
    %v654 = vunpack.c.h.b16 %v243
    %v655 = vunpack.c.l.b16 %v244
    %v656 = vunpack.c.h.b16 %v244
    %v657 = vunpack.c.l.b16 %v245
    %v658 = vunpack.c.h.b16 %v245
    %v659 = vunpack.c.l.b16 %v246
    %v660 = vunpack.c.h.b16 %v246
    %v661 = vunpack.c.l.b16 %v247
    %v662 = vunpack.c.h.b16 %v247
    %v663 = vunpack.c.l.b16 %v248
    %v664 = vunpack.c.h.b16 %v248
    %v665 = vunpack.c.l.b16 %v249
    %v666 = vunpack.c.h.b16 %v249
    %v667 = vunpack.c.l.b16 %v250
    %v668 = vunpack.c.h.b16 %v250
    %v669 = vunpack.c.l.b16 %v251
    %v670 = vunpack.c.h.b16 %v251
    %v671 = vunpack.c.l.b16 %v252
    %v672 = vunpack.c.h.b16 %v252
    %v673 = vunpack.c.l.b16 %v253
    %v674 = vunpack.c.h.b16 %v253
    %v675 = vunpack.c.l.b16 %v254
    %v676 = vunpack.c.h.b16 %v254
    %v677 = vunpack.c.l.b16 %v255
    %v678 = vunpack.c.h.b16 %v255
    %v679 = vunpack.c.l.b16 %v256
    %v680 = vunpack.c.h.b16 %v256
    %v681 = vunpack.c.l.b16 %v257
    %v682 = vunpack.c.h.b16 %v257
    %v683 = vunpack.c.l.b16 %v258
    %v684 = vunpack.c.h.b16 %v258
    %v685 = vpack.c.b16 %v437, %v429
    %v686 = vpack.c.b16 %v438, %v430
    %v687 = vpack.c.b16 %v439, %v431
    %v688 = vpack.c.b16 %v440, %v432
    %v689 = vpack.c.b16 %v441, %v433
    %v690 = vpack.c.b16 %v442, %v434
    %v691 = vpack.c.b16 %v443, %v435
    %v692 = vpack.c.b16 %v444, %v436
    %v693 = vpack.c.b16 %v453, %v445
    %v694 = vpack.c.b16 %v454, %v446
    %v695 = vpack.c.b16 %v455, %v447
    %v696 = vpack.c.b16 %v456, %v448
    %v697 = vpack.c.b16 %v457, %v449
    %v698 = vpack.c.b16 %v458, %v450
    %v699 = vpack.c.b16 %v459, %v451
    %v700 = vpack.c.b16 %v460, %v452
    %v701 = vpack.c.b16 %v469, %v461
    %v702 = vpack.c.b16 %v470, %v462
    %v703 = vpack.c.b16 %v471, %v463
    %v704 = vpack.c.b16 %v472, %v464
    %v705 = vpack.c.b16 %v473, %v465
    %v706 = vpack.c.b16 %v474, %v466
    %v707 = vpack.c.b16 %v475, %v467
    %v708 = vpack.c.b16 %v476, %v468
    %v709 = vpack.c.b16 %v485, %v477
    %v710 = vpack.c.b16 %v486, %v478
    %v711 = vpack.c.b16 %v487, %v479
    %v712 = vpack.c.b16 %v488, %v480
    %v713 = vpack.c.b16 %v489, %v481
    %v714 = vpack.c.b16 %v490, %v482
    %v715 = vpack.c.b16 %v491, %v483
    %v716 = vpack.c.b16 %v492, %v484
    %v717 = vpack.c.b16 %v501, %v493
    %v718 = vpack.c.b16 %v502, %v494
    %v719 = vpack.c.b16 %v503, %v495
    %v720 = vpack.c.b16 %v504, %v496
    %v721 = vpack.c.b16 %v505, %v497
    %v722 = vpack.c.b16 %v506, %v498
    %v723 = vpack.c.b16 %v507, %v499
    %v724 = vpack.c.b16 %v508, %v500
    %v725 = vpack.c.b16 %v517, %v509
    %v726 = vpack.c.b16 %v518, %v510
    %v727 = vpack.c.b16 %v519, %v511
    %v728 = vpack.c.b16 %v520, %v512
    %v729 = vpack.c.b16 %v521, %v513
    %v730 = vpack.c.b16 %v522, %v514
    %v731 = vpack.c.b16 %v523, %v515
    %v732 = vpack.c.b16 %v524, %v516
    %v733 = vpack.c.b16 %v533, %v525
    %v734 = vpack.c.b16 %v534, %v526
    %v735 = vpack.c.b16 %v535, %v527
    %v736 = vpack.c.b16 %v536, %v528
    %v737 = vpack.c.b16 %v537, %v529
    %v738 = vpack.c.b16 %v538, %v530
    %v739 = vpack.c.b16 %v539, %v531
    %v740 = vpack.c.b16 %v540, %v532
    %v741 = vpack.c.b16 %v549, %v541
    %v742 = vpack.c.b16 %v550, %v542
    %v743 = vpack.c.b16 %v551, %v543
    %v744 = vpack.c.b16 %v552, %v544
    %v745 = vpack.c.b16 %v553, %v545
    %v746 = vpack.c.b16 %v554, %v546
    %v747 = vpack.c.b16 %v555, %v547
    %v748 = vpack.c.b16 %v556, %v548
    %v749 = vpack.c.b16 %v565, %v557
    %v750 = vpack.c.b16 %v566, %v558
    %v751 = vpack.c.b16 %v567, %v559
    %v752 = vpack.c.b16 %v568, %v560
    %v753 = vpack.c.b16 %v569, %v561
    %v754 = vpack.c.b16 %v570, %v562
    %v755 = vpack.c.b16 %v571, %v563
    %v756 = vpack.c.b16 %v572, %v564
    %v757 = vpack.c.b16 %v581, %v573
    %v758 = vpack.c.b16 %v582, %v574
    %v759 = vpack.c.b16 %v583, %v575
    %v760 = vpack.c.b16 %v584, %v576
    %v761 = vpack.c.b16 %v585, %v577
    %v762 = vpack.c.b16 %v586, %v578
    %v763 = vpack.c.b16 %v587, %v579
    %v764 = vpack.c.b16 %v588, %v580
    %v765 = vpack.c.b16 %v597, %v589
    %v766 = vpack.c.b16 %v598, %v590
    %v767 = vpack.c.b16 %v599, %v591
    %v768 = vpack.c.b16 %v600, %v592
    %v769 = vpack.c.b16 %v601, %v593
    %v770 = vpack.c.b16 %v602, %v594
    %v771 = vpack.c.b16 %v603, %v595
    %v772 = vpack.c.b16 %v604, %v596
    %v773 = vpack.c.b16 %v613, %v605
    %v774 = vpack.c.b16 %v614, %v606
    %v775 = vpack.c.b16 %v615, %v607
    %v776 = vpack.c.b16 %v616, %v608
    %v777 = vpack.c.b16 %v617, %v609
    %v778 = vpack.c.b16 %v618, %v610
    %v779 = vpack.c.b16 %v619, %v611
    %v780 = vpack.c.b16 %v620, %v612
    %v781 = vpack.c.b16 %v629, %v621
    %v782 = vpack.c.b16 %v630, %v622
    %v783 = vpack.c.b16 %v631, %v623
    %v784 = vpack.c.b16 %v632, %v624
    %v785 = vpack.c.b16 %v633, %v625
    %v786 = vpack.c.b16 %v634, %v626
    %v787 = vpack.c.b16 %v635, %v627
    %v788 = vpack.c.b16 %v636, %v628
    %v789 = vpack.c.b16 %v645, %v637
    %v790 = vpack.c.b16 %v646, %v638
    %v791 = vpack.c.b16 %v647, %v639
    %v792 = vpack.c.b16 %v648, %v640
    %v793 = vpack.c.b16 %v649, %v641
    %v794 = vpack.c.b16 %v650, %v642
    %v795 = vpack.c.b16 %v651, %v643
    %v796 = vpack.c.b16 %v652, %v644
    %v797 = vpack.c.b16 %v661, %v653
    %v798 = vpack.c.b16 %v662, %v654
    %v799 = vpack.c.b16 %v663, %v655
    %v800 = vpack.c.b16 %v664, %v656
    %v801 = vpack.c.b16 %v665, %v657
    %v802 = vpack.c.b16 %v666, %v658
    %v803 = vpack.c.b16 %v667, %v659
    %v804 = vpack.c.b16 %v668, %v660
    %v805 = vpack.c.b16 %v677, %v669
    %v806 = vpack.c.b16 %v678, %v670
    %v807 = vpack.c.b16 %v679, %v671
    %v808 = vpack.c.b16 %v680, %v672
    %v809 = vpack.c.b16 %v681, %v673
    %v810 = vpack.c.b16 %v682, %v674
    %v811 = vpack.c.b16 %v683, %v675
    %v812 = vpack.c.b16 %v684, %v676
    %941 = vmatprep.subr.bf16.mxu0 %v742
    %942 = vmatpush1.bf16.msra.mxu0 %v741
    %943 = vmatprep.subr.bf16.mxu0 %v734
    %944 = vmatpush1.bf16.msra.mxu0 %v733
    %945 = vmatprep.subr.bf16.mxu0 %v726
    %946 = vmatpush1.bf16.msra.mxu0 %v725
    %947 = vmatprep.subr.bf16.mxu0 %v718
    %948 = vmatpush1.bf16.msra.mxu0 %v717
    %949 = vmatprep.subr.bf16.mxu0 %v710
    %950 = vmatpush1.bf16.msra.mxu0 %v709
    %951 = vmatprep.subr.bf16.mxu0 %v702
    %952 = vmatpush1.bf16.msra.mxu0 %v701
    %953 = vmatprep.subr.bf16.mxu0 %v694
    %954 = vmatpush1.bf16.msra.mxu0 %v693
    %955 = vmatprep.subr.bf16.mxu0 %v686
    %956 = vmatpush1.bf16.msra.mxu0 %v685
    %957 = vmatprep.subr.bf16.mxu0 %v806
    %958 = vmatpush2.bf16.msra.mxu0 %v805
    %959 = vmatprep.subr.bf16.mxu0 %v798
    %960 = vmatpush2.bf16.msra.mxu0 %v797
    %961 = vmatprep.subr.bf16.mxu0 %v790
    %962 = vmatpush2.bf16.msra.mxu0 %v789
    %963 = vmatprep.subr.bf16.mxu0 %v782
    %964 = vmatpush2.bf16.msra.mxu0 %v781
    %965 = vmatprep.subr.bf16.mxu0 %v774
    %966 = vmatpush2.bf16.msra.mxu0 %v773
    %967 = vmatprep.subr.bf16.mxu0 %v766
    %968 = vmatpush2.bf16.msra.mxu0 %v765
    %969 = vmatprep.subr.bf16.mxu0 %v758
    %970 = vmatpush2.bf16.msra.mxu0 %v757
    %971 = vmatprep.subr.bf16.mxu0 %v750
    %972 = vmatpush2.bf16.msra.mxu0 %v749
    %973 = vmatprep.mubr.bf16.mxu0 %v100
    %974 = vmatmul.mubr.bf16.gmra.mxu0 %v99
    %v975 = vpop.f32.mrf.mxu0
    %v976 = vadd.f32 %v264, %v975
    %v977 = vpop.f32.mrf.mxu0
    %v978 = vadd.f32 %v268, %v977
    %v979 = vpop.f32.mrf.mxu0
    %v980 = vadd.f32 %v264, %v979
    %v981 = vpop.f32.mrf.mxu0
    %v982 = vadd.f32 %v268, %v981
    %983 = vmatprep.mubr.bf16.mxu0 %v102
    %984 = vmatmul.mubr.bf16.gmra.mxu0 %v101
    %v985 = vpop.f32.mrf.mxu0
    %v986 = vadd.f32 %v264, %v985
    %v987 = vpop.f32.mrf.mxu0
    %v988 = vadd.f32 %v268, %v987
    %v989 = vpop.f32.mrf.mxu0
    %v990 = vadd.f32 %v264, %v989
    %v991 = vpop.f32.mrf.mxu0
    %v992 = vadd.f32 %v268, %v991
    %993 = vmatprep.mubr.bf16.mxu0 %v104
    %994 = vmatmul.mubr.bf16.gmra.mxu0 %v103
    %v995 = vpop.f32.mrf.mxu0
    %v996 = vadd.f32 %v264, %v995
    %v997 = vpop.f32.mrf.mxu0
    %v998 = vadd.f32 %v268, %v997
    %v999 = vpop.f32.mrf.mxu0
    %v1000 = vadd.f32 %v264, %v999
    %v1001 = vpop.f32.mrf.mxu0
    %v1002 = vadd.f32 %v268, %v1001
    %1003 = vmatprep.mubr.bf16.mxu0 %v106
    %1004 = vmatmul.mubr.bf16.gmra.mxu0 %v105
    %v1005 = vpop.f32.mrf.mxu0
    %v1006 = vadd.f32 %v264, %v1005
    %v1007 = vpop.f32.mrf.mxu0
    %v1008 = vadd.f32 %v268, %v1007
    %v1009 = vpop.f32.mrf.mxu0
    %v1010 = vadd.f32 %v264, %v1009
    %v1011 = vpop.f32.mrf.mxu0
    %v1012 = vadd.f32 %v268, %v1011
    %1013 = vmatprep.mubr.bf16.mxu0 %v108
    %1014 = vmatmul.mubr.bf16.gmra.mxu0 %v107
    %v1015 = vpop.f32.mrf.mxu0
    %v1016 = vadd.f32 %v264, %v1015
    %v1017 = vpop.f32.mrf.mxu0
    %v1018 = vadd.f32 %v268, %v1017
    %v1019 = vpop.f32.mrf.mxu0
    %v1020 = vadd.f32 %v264, %v1019
    %v1021 = vpop.f32.mrf.mxu0
    %v1022 = vadd.f32 %v268, %v1021
    %1023 = vmatprep.mubr.bf16.mxu0 %v110
    %1024 = vmatmul.mubr.bf16.gmra.mxu0 %v109
    %v1025 = vpop.f32.mrf.mxu0
    %v1026 = vadd.f32 %v264, %v1025
    %v1027 = vpop.f32.mrf.mxu0
    %v1028 = vadd.f32 %v268, %v1027
    %v1029 = vpop.f32.mrf.mxu0
    %v1030 = vadd.f32 %v264, %v1029
    %v1031 = vpop.f32.mrf.mxu0
    %v1032 = vadd.f32 %v268, %v1031
    %1033 = vmatprep.mubr.bf16.mxu0 %v112
    %1034 = vmatmul.mubr.bf16.gmra.mxu0 %v111
    %v1035 = vpop.f32.mrf.mxu0
    %v1036 = vadd.f32 %v264, %v1035
    %v1037 = vpop.f32.mrf.mxu0
    %v1038 = vadd.f32 %v268, %v1037
    %v1039 = vpop.f32.mrf.mxu0
    %v1040 = vadd.f32 %v264, %v1039
    %v1041 = vpop.f32.mrf.mxu0
    %v1042 = vadd.f32 %v268, %v1041
    %1043 = vmatprep.mubr.bf16.mxu0 %v114
    %1044 = vmatmul.mubr.bf16.gmra.mxu0 %v113
    %v1045 = vpop.f32.mrf.mxu0
    %v1046 = vadd.f32 %v264, %v1045
    %v1047 = vpop.f32.mrf.mxu0
    %v1048 = vadd.f32 %v268, %v1047
    %v1049 = vpop.f32.mrf.mxu0
    %v1050 = vadd.f32 %v264, %v1049
    %v1051 = vpop.f32.mrf.mxu0
    %v1052 = vadd.f32 %v268, %v1051
    %1053 = vmatprep.mubr.bf16.mxu0 %v116
    %1054 = vmatmul.mubr.bf16.gmra.mxu0 %v115
    %v1055 = vpop.f32.mrf.mxu0
    %v1056 = vadd.f32 %v264, %v1055
    %v1057 = vpop.f32.mrf.mxu0
    %v1058 = vadd.f32 %v268, %v1057
    %v1059 = vpop.f32.mrf.mxu0
    %v1060 = vadd.f32 %v264, %v1059
    %v1061 = vpop.f32.mrf.mxu0
    %v1062 = vadd.f32 %v268, %v1061
    %1063 = vmatprep.mubr.bf16.mxu0 %v118
    %1064 = vmatmul.mubr.bf16.gmra.mxu0 %v117
    %v1065 = vpop.f32.mrf.mxu0
    %v1066 = vadd.f32 %v264, %v1065
    %v1067 = vpop.f32.mrf.mxu0
    %v1068 = vadd.f32 %v268, %v1067
    %v1069 = vpop.f32.mrf.mxu0
    %v1070 = vadd.f32 %v264, %v1069
    %v1071 = vpop.f32.mrf.mxu0
    %v1072 = vadd.f32 %v268, %v1071
    %1073 = vmatprep.mubr.bf16.mxu0 %v120
    %1074 = vmatmul.mubr.bf16.gmra.mxu0 %v119
    %v1075 = vpop.f32.mrf.mxu0
    %v1076 = vadd.f32 %v264, %v1075
    %v1077 = vpop.f32.mrf.mxu0
    %v1078 = vadd.f32 %v268, %v1077
    %v1079 = vpop.f32.mrf.mxu0
    %v1080 = vadd.f32 %v264, %v1079
    %v1081 = vpop.f32.mrf.mxu0
    %v1082 = vadd.f32 %v268, %v1081
    %1083 = vmatprep.mubr.bf16.mxu0 %v122
    %1084 = vmatmul.mubr.bf16.gmra.mxu0 %v121
    %v1085 = vpop.f32.mrf.mxu0
    %v1086 = vadd.f32 %v264, %v1085
    %v1087 = vpop.f32.mrf.mxu0
    %v1088 = vadd.f32 %v268, %v1087
    %v1089 = vpop.f32.mrf.mxu0
    %v1090 = vadd.f32 %v264, %v1089
    %v1091 = vpop.f32.mrf.mxu0
    %v1092 = vadd.f32 %v268, %v1091
    %1093 = vmatprep.mubr.bf16.mxu0 %v124
    %1094 = vmatmul.mubr.bf16.gmra.mxu0 %v123
    %v1095 = vpop.f32.mrf.mxu0
    %v1096 = vadd.f32 %v264, %v1095
    %v1097 = vpop.f32.mrf.mxu0
    %v1098 = vadd.f32 %v268, %v1097
    %v1099 = vpop.f32.mrf.mxu0
    %v1100 = vadd.f32 %v264, %v1099
    %v1101 = vpop.f32.mrf.mxu0
    %v1102 = vadd.f32 %v268, %v1101
    %1103 = vmatprep.mubr.bf16.mxu0 %v126
    %1104 = vmatmul.mubr.bf16.gmra.mxu0 %v125
    %v1105 = vpop.f32.mrf.mxu0
    %v1106 = vadd.f32 %v264, %v1105
    %v1107 = vpop.f32.mrf.mxu0
    %v1108 = vadd.f32 %v268, %v1107
    %v1109 = vpop.f32.mrf.mxu0
    %v1110 = vadd.f32 %v264, %v1109
    %v1111 = vpop.f32.mrf.mxu0
    %v1112 = vadd.f32 %v268, %v1111
    %1113 = vmatprep.mubr.bf16.mxu0 %v128
    %1114 = vmatmul.mubr.bf16.gmra.mxu0 %v127
    %v1115 = vpop.f32.mrf.mxu0
    %v1116 = vadd.f32 %v264, %v1115
    %v1117 = vpop.f32.mrf.mxu0
    %v1118 = vadd.f32 %v268, %v1117
    %v1119 = vpop.f32.mrf.mxu0
    %v1120 = vadd.f32 %v264, %v1119
    %v1121 = vpop.f32.mrf.mxu0
    %v1122 = vadd.f32 %v268, %v1121
    %1123 = vmatprep.mubr.bf16.mxu0 %v130
    %1124 = vmatmul.mubr.bf16.gmra.mxu0 %v129
    %v1125 = vpop.f32.mrf.mxu0
    %v1126 = vadd.f32 %v264, %v1125
    %v1127 = vpop.f32.mrf.mxu0
    %v1128 = vadd.f32 %v268, %v1127
    %v1129 = vpop.f32.mrf.mxu0
    %v1130 = vadd.f32 %v264, %v1129
    %v1131 = vpop.f32.mrf.mxu0
    %v1132 = vadd.f32 %v268, %v1131
    %1133 = vdwg.mxu0
    %1134 = vmatprep.subr.bf16.mxu0 %v744
    %1135 = vmatpush1.bf16.msra.mxu0 %v743
    %1136 = vmatprep.subr.bf16.mxu0 %v736
    %1137 = vmatpush1.bf16.msra.mxu0 %v735
    %1138 = vmatprep.subr.bf16.mxu0 %v728
    %1139 = vmatpush1.bf16.msra.mxu0 %v727
    %1140 = vmatprep.subr.bf16.mxu0 %v720
    %1141 = vmatpush1.bf16.msra.mxu0 %v719
    %1142 = vmatprep.subr.bf16.mxu0 %v712
    %1143 = vmatpush1.bf16.msra.mxu0 %v711
    %1144 = vmatprep.subr.bf16.mxu0 %v704
    %1145 = vmatpush1.bf16.msra.mxu0 %v703
    %1146 = vmatprep.subr.bf16.mxu0 %v696
    %1147 = vmatpush1.bf16.msra.mxu0 %v695
    %1148 = vmatprep.subr.bf16.mxu0 %v688
    %1149 = vmatpush1.bf16.msra.mxu0 %v687
    %1150 = vmatprep.subr.bf16.mxu0 %v808
    %1151 = vmatpush2.bf16.msra.mxu0 %v807
    %1152 = vmatprep.subr.bf16.mxu0 %v800
    %1153 = vmatpush2.bf16.msra.mxu0 %v799
    %1154 = vmatprep.subr.bf16.mxu0 %v792
    %1155 = vmatpush2.bf16.msra.mxu0 %v791
    %1156 = vmatprep.subr.bf16.mxu0 %v784
    %1157 = vmatpush2.bf16.msra.mxu0 %v783
    %1158 = vmatprep.subr.bf16.mxu0 %v776
    %1159 = vmatpush2.bf16.msra.mxu0 %v775
    %1160 = vmatprep.subr.bf16.mxu0 %v768
    %1161 = vmatpush2.bf16.msra.mxu0 %v767
    %1162 = vmatprep.subr.bf16.mxu0 %v760
    %1163 = vmatpush2.bf16.msra.mxu0 %v759
    %1164 = vmatprep.subr.bf16.mxu0 %v752
    %1165 = vmatpush2.bf16.msra.mxu0 %v751
    %1166 = vmatprep.mubr.bf16.mxu0 %v100
    %1167 = vmatmul.mubr.bf16.gmra.mxu0 %v99
    %v1168 = vpop.f32.mrf.mxu0
    %v1169 = vadd.f32 %v272, %v1168
    %v1170 = vpop.f32.mrf.mxu0
    %v1171 = vadd.f32 %v276, %v1170
    %v1172 = vpop.f32.mrf.mxu0
    %v1173 = vadd.f32 %v272, %v1172
    %v1174 = vpop.f32.mrf.mxu0
    %v1175 = vadd.f32 %v276, %v1174
    %1176 = vmatprep.mubr.bf16.mxu0 %v102
    %1177 = vmatmul.mubr.bf16.gmra.mxu0 %v101
    %v1178 = vpop.f32.mrf.mxu0
    %v1179 = vadd.f32 %v272, %v1178
    %v1180 = vpop.f32.mrf.mxu0
    %v1181 = vadd.f32 %v276, %v1180
    %v1182 = vpop.f32.mrf.mxu0
    %v1183 = vadd.f32 %v272, %v1182
    %v1184 = vpop.f32.mrf.mxu0
    %v1185 = vadd.f32 %v276, %v1184
    %1186 = vmatprep.mubr.bf16.mxu0 %v104
    %1187 = vmatmul.mubr.bf16.gmra.mxu0 %v103
    %v1188 = vpop.f32.mrf.mxu0
    %v1189 = vadd.f32 %v272, %v1188
    %v1190 = vpop.f32.mrf.mxu0
    %v1191 = vadd.f32 %v276, %v1190
    %v1192 = vpop.f32.mrf.mxu0
    %v1193 = vadd.f32 %v272, %v1192
    %v1194 = vpop.f32.mrf.mxu0
    %v1195 = vadd.f32 %v276, %v1194
    %1196 = vmatprep.mubr.bf16.mxu0 %v106
    %1197 = vmatmul.mubr.bf16.gmra.mxu0 %v105
    %v1198 = vpop.f32.mrf.mxu0
    %v1199 = vadd.f32 %v272, %v1198
    %v1200 = vpop.f32.mrf.mxu0
    %v1201 = vadd.f32 %v276, %v1200
    %v1202 = vpop.f32.mrf.mxu0
    %v1203 = vadd.f32 %v272, %v1202
    %v1204 = vpop.f32.mrf.mxu0
    %v1205 = vadd.f32 %v276, %v1204
    %1206 = vmatprep.mubr.bf16.mxu0 %v108
    %1207 = vmatmul.mubr.bf16.gmra.mxu0 %v107
    %v1208 = vpop.f32.mrf.mxu0
    %v1209 = vadd.f32 %v272, %v1208
    %v1210 = vpop.f32.mrf.mxu0
    %v1211 = vadd.f32 %v276, %v1210
    %v1212 = vpop.f32.mrf.mxu0
    %v1213 = vadd.f32 %v272, %v1212
    %v1214 = vpop.f32.mrf.mxu0
    %v1215 = vadd.f32 %v276, %v1214
    %1216 = vmatprep.mubr.bf16.mxu0 %v110
    %1217 = vmatmul.mubr.bf16.gmra.mxu0 %v109
    %v1218 = vpop.f32.mrf.mxu0
    %v1219 = vadd.f32 %v272, %v1218
    %v1220 = vpop.f32.mrf.mxu0
    %v1221 = vadd.f32 %v276, %v1220
    %v1222 = vpop.f32.mrf.mxu0
    %v1223 = vadd.f32 %v272, %v1222
    %v1224 = vpop.f32.mrf.mxu0
    %v1225 = vadd.f32 %v276, %v1224
    %1226 = vmatprep.mubr.bf16.mxu0 %v112
    %1227 = vmatmul.mubr.bf16.gmra.mxu0 %v111
    %v1228 = vpop.f32.mrf.mxu0
    %v1229 = vadd.f32 %v272, %v1228
    %v1230 = vpop.f32.mrf.mxu0
    %v1231 = vadd.f32 %v276, %v1230
    %v1232 = vpop.f32.mrf.mxu0
    %v1233 = vadd.f32 %v272, %v1232
    %v1234 = vpop.f32.mrf.mxu0
    %v1235 = vadd.f32 %v276, %v1234
    %1236 = vmatprep.mubr.bf16.mxu0 %v114
    %1237 = vmatmul.mubr.bf16.gmra.mxu0 %v113
    %v1238 = vpop.f32.mrf.mxu0
    %v1239 = vadd.f32 %v272, %v1238
    %v1240 = vpop.f32.mrf.mxu0
    %v1241 = vadd.f32 %v276, %v1240
    %v1242 = vpop.f32.mrf.mxu0
    %v1243 = vadd.f32 %v272, %v1242
    %v1244 = vpop.f32.mrf.mxu0
    %v1245 = vadd.f32 %v276, %v1244
    %1246 = vmatprep.mubr.bf16.mxu0 %v116
    %1247 = vmatmul.mubr.bf16.gmra.mxu0 %v115
    %v1248 = vpop.f32.mrf.mxu0
    %v1249 = vadd.f32 %v272, %v1248
    %v1250 = vpop.f32.mrf.mxu0
    %v1251 = vadd.f32 %v276, %v1250
    %v1252 = vpop.f32.mrf.mxu0
    %v1253 = vadd.f32 %v272, %v1252
    %v1254 = vpop.f32.mrf.mxu0
    %v1255 = vadd.f32 %v276, %v1254
    %1256 = vmatprep.mubr.bf16.mxu0 %v118
    %1257 = vmatmul.mubr.bf16.gmra.mxu0 %v117
    %v1258 = vpop.f32.mrf.mxu0
    %v1259 = vadd.f32 %v272, %v1258
    %v1260 = vpop.f32.mrf.mxu0
    %v1261 = vadd.f32 %v276, %v1260
    %v1262 = vpop.f32.mrf.mxu0
    %v1263 = vadd.f32 %v272, %v1262
    %v1264 = vpop.f32.mrf.mxu0
    %v1265 = vadd.f32 %v276, %v1264
    %1266 = vmatprep.mubr.bf16.mxu0 %v120
    %1267 = vmatmul.mubr.bf16.gmra.mxu0 %v119
    %v1268 = vpop.f32.mrf.mxu0
    %v1269 = vadd.f32 %v272, %v1268
    %v1270 = vpop.f32.mrf.mxu0
    %v1271 = vadd.f32 %v276, %v1270
    %v1272 = vpop.f32.mrf.mxu0
    %v1273 = vadd.f32 %v272, %v1272
    %v1274 = vpop.f32.mrf.mxu0
    %v1275 = vadd.f32 %v276, %v1274
    %1276 = vmatprep.mubr.bf16.mxu0 %v122
    %1277 = vmatmul.mubr.bf16.gmra.mxu0 %v121
    %v1278 = vpop.f32.mrf.mxu0
    %v1279 = vadd.f32 %v272, %v1278
    %v1280 = vpop.f32.mrf.mxu0
    %v1281 = vadd.f32 %v276, %v1280
    %v1282 = vpop.f32.mrf.mxu0
    %v1283 = vadd.f32 %v272, %v1282
    %v1284 = vpop.f32.mrf.mxu0
    %v1285 = vadd.f32 %v276, %v1284
    %1286 = vmatprep.mubr.bf16.mxu0 %v124
    %1287 = vmatmul.mubr.bf16.gmra.mxu0 %v123
    %v1288 = vpop.f32.mrf.mxu0
    %v1289 = vadd.f32 %v272, %v1288
    %v1290 = vpop.f32.mrf.mxu0
    %v1291 = vadd.f32 %v276, %v1290
    %v1292 = vpop.f32.mrf.mxu0
    %v1293 = vadd.f32 %v272, %v1292
    %v1294 = vpop.f32.mrf.mxu0
    %v1295 = vadd.f32 %v276, %v1294
    %1296 = vmatprep.mubr.bf16.mxu0 %v126
    %1297 = vmatmul.mubr.bf16.gmra.mxu0 %v125
    %v1298 = vpop.f32.mrf.mxu0
    %v1299 = vadd.f32 %v272, %v1298
    %v1300 = vpop.f32.mrf.mxu0
    %v1301 = vadd.f32 %v276, %v1300
    %v1302 = vpop.f32.mrf.mxu0
    %v1303 = vadd.f32 %v272, %v1302
    %v1304 = vpop.f32.mrf.mxu0
    %v1305 = vadd.f32 %v276, %v1304
    %1306 = vmatprep.mubr.bf16.mxu0 %v128
    %1307 = vmatmul.mubr.bf16.gmra.mxu0 %v127
    %v1308 = vpop.f32.mrf.mxu0
    %v1309 = vadd.f32 %v272, %v1308
    %v1310 = vpop.f32.mrf.mxu0
    %v1311 = vadd.f32 %v276, %v1310
    %v1312 = vpop.f32.mrf.mxu0
    %v1313 = vadd.f32 %v272, %v1312
    %v1314 = vpop.f32.mrf.mxu0
    %v1315 = vadd.f32 %v276, %v1314
    %1316 = vmatprep.mubr.bf16.mxu0 %v130
    %1317 = vmatmul.mubr.bf16.gmra.mxu0 %v129
    %v1318 = vpop.f32.mrf.mxu0
    %v1319 = vadd.f32 %v272, %v1318
    %v1320 = vpop.f32.mrf.mxu0
    %v1321 = vadd.f32 %v276, %v1320
    %v1322 = vpop.f32.mrf.mxu0
    %v1323 = vadd.f32 %v272, %v1322
    %v1324 = vpop.f32.mrf.mxu0
    %v1325 = vadd.f32 %v276, %v1324
    %1326 = vdwg.mxu0
    %1327 = vmatprep.subr.bf16.mxu0 %v746
    %1328 = vmatpush1.bf16.msra.mxu0 %v745
    %1329 = vmatprep.subr.bf16.mxu0 %v738
    %1330 = vmatpush1.bf16.msra.mxu0 %v737
    %1331 = vmatprep.subr.bf16.mxu0 %v730
    %1332 = vmatpush1.bf16.msra.mxu0 %v729
    %1333 = vmatprep.subr.bf16.mxu0 %v722
    %1334 = vmatpush1.bf16.msra.mxu0 %v721
    %1335 = vmatprep.subr.bf16.mxu0 %v714
    %1336 = vmatpush1.bf16.msra.mxu0 %v713
    %1337 = vmatprep.subr.bf16.mxu0 %v706
    %1338 = vmatpush1.bf16.msra.mxu0 %v705
    %1339 = vmatprep.subr.bf16.mxu0 %v698
    %1340 = vmatpush1.bf16.msra.mxu0 %v697
    %1341 = vmatprep.subr.bf16.mxu0 %v690
    %1342 = vmatpush1.bf16.msra.mxu0 %v689
    %1343 = vmatprep.subr.bf16.mxu0 %v810
    %1344 = vmatpush2.bf16.msra.mxu0 %v809
    %1345 = vmatprep.subr.bf16.mxu0 %v802
    %1346 = vmatpush2.bf16.msra.mxu0 %v801
    %1347 = vmatprep.subr.bf16.mxu0 %v794
    %1348 = vmatpush2.bf16.msra.mxu0 %v793
    %1349 = vmatprep.subr.bf16.mxu0 %v786
    %1350 = vmatpush2.bf16.msra.mxu0 %v785
    %1351 = vmatprep.subr.bf16.mxu0 %v778
    %1352 = vmatpush2.bf16.msra.mxu0 %v777
    %1353 = vmatprep.subr.bf16.mxu0 %v770
    %1354 = vmatpush2.bf16.msra.mxu0 %v769
    %1355 = vmatprep.subr.bf16.mxu0 %v762
    %1356 = vmatpush2.bf16.msra.mxu0 %v761
    %1357 = vmatprep.subr.bf16.mxu0 %v754
    %1358 = vmatpush2.bf16.msra.mxu0 %v753
    %1359 = vmatprep.mubr.bf16.mxu0 %v100
    %1360 = vmatmul.mubr.bf16.gmra.mxu0 %v99
    %v1361 = vpop.f32.mrf.mxu0
    %v1362 = vadd.f32 %v280, %v1361
    %v1363 = vpop.f32.mrf.mxu0
    %v1364 = vadd.f32 %v284, %v1363
    %v1365 = vpop.f32.mrf.mxu0
    %v1366 = vadd.f32 %v280, %v1365
    %v1367 = vpop.f32.mrf.mxu0
    %v1368 = vadd.f32 %v284, %v1367
    %1369 = vmatprep.mubr.bf16.mxu0 %v102
    %1370 = vmatmul.mubr.bf16.gmra.mxu0 %v101
    %v1371 = vpop.f32.mrf.mxu0
    %v1372 = vadd.f32 %v280, %v1371
    %v1373 = vpop.f32.mrf.mxu0
    %v1374 = vadd.f32 %v284, %v1373
    %v1375 = vpop.f32.mrf.mxu0
    %v1376 = vadd.f32 %v280, %v1375
    %v1377 = vpop.f32.mrf.mxu0
    %v1378 = vadd.f32 %v284, %v1377
    %1379 = vmatprep.mubr.bf16.mxu0 %v104
    %1380 = vmatmul.mubr.bf16.gmra.mxu0 %v103
    %v1381 = vpop.f32.mrf.mxu0
    %v1382 = vadd.f32 %v280, %v1381
    %v1383 = vpop.f32.mrf.mxu0
    %v1384 = vadd.f32 %v284, %v1383
    %v1385 = vpop.f32.mrf.mxu0
    %v1386 = vadd.f32 %v280, %v1385
    %v1387 = vpop.f32.mrf.mxu0
    %v1388 = vadd.f32 %v284, %v1387
    %1389 = vmatprep.mubr.bf16.mxu0 %v106
    %1390 = vmatmul.mubr.bf16.gmra.mxu0 %v105
    %v1391 = vpop.f32.mrf.mxu0
    %v1392 = vadd.f32 %v280, %v1391
    %v1393 = vpop.f32.mrf.mxu0
    %v1394 = vadd.f32 %v284, %v1393
    %v1395 = vpop.f32.mrf.mxu0
    %v1396 = vadd.f32 %v280, %v1395
    %v1397 = vpop.f32.mrf.mxu0
    %v1398 = vadd.f32 %v284, %v1397
    %1399 = vmatprep.mubr.bf16.mxu0 %v108
    %1400 = vmatmul.mubr.bf16.gmra.mxu0 %v107
    %v1401 = vpop.f32.mrf.mxu0
    %v1402 = vadd.f32 %v280, %v1401
    %v1403 = vpop.f32.mrf.mxu0
    %v1404 = vadd.f32 %v284, %v1403
    %v1405 = vpop.f32.mrf.mxu0
    %v1406 = vadd.f32 %v280, %v1405
    %v1407 = vpop.f32.mrf.mxu0
    %v1408 = vadd.f32 %v284, %v1407
    %1409 = vmatprep.mubr.bf16.mxu0 %v110
    %1410 = vmatmul.mubr.bf16.gmra.mxu0 %v109
    %v1411 = vpop.f32.mrf.mxu0
    %v1412 = vadd.f32 %v280, %v1411
    %v1413 = vpop.f32.mrf.mxu0
    %v1414 = vadd.f32 %v284, %v1413
    %v1415 = vpop.f32.mrf.mxu0
    %v1416 = vadd.f32 %v280, %v1415
    %v1417 = vpop.f32.mrf.mxu0
    %v1418 = vadd.f32 %v284, %v1417
    %1419 = vmatprep.mubr.bf16.mxu0 %v112
    %1420 = vmatmul.mubr.bf16.gmra.mxu0 %v111
    %v1421 = vpop.f32.mrf.mxu0
    %v1422 = vadd.f32 %v280, %v1421
    %v1423 = vpop.f32.mrf.mxu0
    %v1424 = vadd.f32 %v284, %v1423
    %v1425 = vpop.f32.mrf.mxu0
    %v1426 = vadd.f32 %v280, %v1425
    %v1427 = vpop.f32.mrf.mxu0
    %v1428 = vadd.f32 %v284, %v1427
    %1429 = vmatprep.mubr.bf16.mxu0 %v114
    %1430 = vmatmul.mubr.bf16.gmra.mxu0 %v113
    %v1431 = vpop.f32.mrf.mxu0
    %v1432 = vadd.f32 %v280, %v1431
    %v1433 = vpop.f32.mrf.mxu0
    %v1434 = vadd.f32 %v284, %v1433
    %v1435 = vpop.f32.mrf.mxu0
    %v1436 = vadd.f32 %v280, %v1435
    %v1437 = vpop.f32.mrf.mxu0
    %v1438 = vadd.f32 %v284, %v1437
    %1439 = vmatprep.mubr.bf16.mxu0 %v116
    %1440 = vmatmul.mubr.bf16.gmra.mxu0 %v115
    %v1441 = vpop.f32.mrf.mxu0
    %v1442 = vadd.f32 %v280, %v1441
    %v1443 = vpop.f32.mrf.mxu0
    %v1444 = vadd.f32 %v284, %v1443
    %v1445 = vpop.f32.mrf.mxu0
    %v1446 = vadd.f32 %v280, %v1445
    %v1447 = vpop.f32.mrf.mxu0
    %v1448 = vadd.f32 %v284, %v1447
    %1449 = vmatprep.mubr.bf16.mxu0 %v118
    %1450 = vmatmul.mubr.bf16.gmra.mxu0 %v117
    %v1451 = vpop.f32.mrf.mxu0
    %v1452 = vadd.f32 %v280, %v1451
    %v1453 = vpop.f32.mrf.mxu0
    %v1454 = vadd.f32 %v284, %v1453
    %v1455 = vpop.f32.mrf.mxu0
    %v1456 = vadd.f32 %v280, %v1455
    %v1457 = vpop.f32.mrf.mxu0
    %v1458 = vadd.f32 %v284, %v1457
    %1459 = vmatprep.mubr.bf16.mxu0 %v120
    %1460 = vmatmul.mubr.bf16.gmra.mxu0 %v119
    %v1461 = vpop.f32.mrf.mxu0
    %v1462 = vadd.f32 %v280, %v1461
    %v1463 = vpop.f32.mrf.mxu0
    %v1464 = vadd.f32 %v284, %v1463
    %v1465 = vpop.f32.mrf.mxu0
    %v1466 = vadd.f32 %v280, %v1465
    %v1467 = vpop.f32.mrf.mxu0
    %v1468 = vadd.f32 %v284, %v1467
    %1469 = vmatprep.mubr.bf16.mxu0 %v122
    %1470 = vmatmul.mubr.bf16.gmra.mxu0 %v121
    %v1471 = vpop.f32.mrf.mxu0
    %v1472 = vadd.f32 %v280, %v1471
    %v1473 = vpop.f32.mrf.mxu0
    %v1474 = vadd.f32 %v284, %v1473
    %v1475 = vpop.f32.mrf.mxu0
    %v1476 = vadd.f32 %v280, %v1475
    %v1477 = vpop.f32.mrf.mxu0
    %v1478 = vadd.f32 %v284, %v1477
    %1479 = vmatprep.mubr.bf16.mxu0 %v124
    %1480 = vmatmul.mubr.bf16.gmra.mxu0 %v123
    %v1481 = vpop.f32.mrf.mxu0
    %v1482 = vadd.f32 %v280, %v1481
    %v1483 = vpop.f32.mrf.mxu0
    %v1484 = vadd.f32 %v284, %v1483
    %v1485 = vpop.f32.mrf.mxu0
    %v1486 = vadd.f32 %v280, %v1485
    %v1487 = vpop.f32.mrf.mxu0
    %v1488 = vadd.f32 %v284, %v1487
    %1489 = vmatprep.mubr.bf16.mxu0 %v126
    %1490 = vmatmul.mubr.bf16.gmra.mxu0 %v125
    %v1491 = vpop.f32.mrf.mxu0
    %v1492 = vadd.f32 %v280, %v1491
    %v1493 = vpop.f32.mrf.mxu0
    %v1494 = vadd.f32 %v284, %v1493
    %v1495 = vpop.f32.mrf.mxu0
    %v1496 = vadd.f32 %v280, %v1495
    %v1497 = vpop.f32.mrf.mxu0
    %v1498 = vadd.f32 %v284, %v1497
    %1499 = vmatprep.mubr.bf16.mxu0 %v128
    %1500 = vmatmul.mubr.bf16.gmra.mxu0 %v127
    %v1501 = vpop.f32.mrf.mxu0
    %v1502 = vadd.f32 %v280, %v1501
    %v1503 = vpop.f32.mrf.mxu0
    %v1504 = vadd.f32 %v284, %v1503
    %v1505 = vpop.f32.mrf.mxu0
    %v1506 = vadd.f32 %v280, %v1505
    %v1507 = vpop.f32.mrf.mxu0
    %v1508 = vadd.f32 %v284, %v1507
    %1509 = vmatprep.mubr.bf16.mxu0 %v130
    %1510 = vmatmul.mubr.bf16.gmra.mxu0 %v129
    %v1511 = vpop.f32.mrf.mxu0
    %v1512 = vadd.f32 %v280, %v1511
    %v1513 = vpop.f32.mrf.mxu0
    %v1514 = vadd.f32 %v284, %v1513
    %v1515 = vpop.f32.mrf.mxu0
    %v1516 = vadd.f32 %v280, %v1515
    %v1517 = vpop.f32.mrf.mxu0
    %v1518 = vadd.f32 %v284, %v1517
    %1519 = vdwg.mxu0
    %1520 = vmatprep.subr.bf16.mxu0 %v748
    %1521 = vmatpush1.bf16.msra.mxu0 %v747
    %1522 = vmatprep.subr.bf16.mxu0 %v740
    %1523 = vmatpush1.bf16.msra.mxu0 %v739
    %1524 = vmatprep.subr.bf16.mxu0 %v732
    %1525 = vmatpush1.bf16.msra.mxu0 %v731
    %1526 = vmatprep.subr.bf16.mxu0 %v724
    %1527 = vmatpush1.bf16.msra.mxu0 %v723
    %1528 = vmatprep.subr.bf16.mxu0 %v716
    %1529 = vmatpush1.bf16.msra.mxu0 %v715
    %1530 = vmatprep.subr.bf16.mxu0 %v708
    %1531 = vmatpush1.bf16.msra.mxu0 %v707
    %1532 = vmatprep.subr.bf16.mxu0 %v700
    %1533 = vmatpush1.bf16.msra.mxu0 %v699
    %1534 = vmatprep.subr.bf16.mxu0 %v692
    %1535 = vmatpush1.bf16.msra.mxu0 %v691
    %1536 = vmatprep.subr.bf16.mxu0 %v812
    %1537 = vmatpush2.bf16.msra.mxu0 %v811
    %1538 = vmatprep.subr.bf16.mxu0 %v804
    %1539 = vmatpush2.bf16.msra.mxu0 %v803
    %1540 = vmatprep.subr.bf16.mxu0 %v796
    %1541 = vmatpush2.bf16.msra.mxu0 %v795
    %1542 = vmatprep.subr.bf16.mxu0 %v788
    %1543 = vmatpush2.bf16.msra.mxu0 %v787
    %1544 = vmatprep.subr.bf16.mxu0 %v780
    %1545 = vmatpush2.bf16.msra.mxu0 %v779
    %1546 = vmatprep.subr.bf16.mxu0 %v772
    %1547 = vmatpush2.bf16.msra.mxu0 %v771
    %1548 = vmatprep.subr.bf16.mxu0 %v764
    %1549 = vmatpush2.bf16.msra.mxu0 %v763
    %1550 = vmatprep.subr.bf16.mxu0 %v756
    %1551 = vmatpush2.bf16.msra.mxu0 %v755
    %1552 = vmatprep.mubr.bf16.mxu0 %v100
    %1553 = vmatmul.mubr.bf16.gmra.mxu0 %v99
    %v1554 = vpop.f32.mrf.mxu0
    %v1555 = vadd.f32 %v288, %v1554
    %v1556 = vpop.f32.mrf.mxu0
    %v1557 = vadd.f32 %v292, %v1556
    %v1558 = vpop.f32.mrf.mxu0
    %v1559 = vadd.f32 %v288, %v1558
    %v1560 = vpop.f32.mrf.mxu0
    %v1561 = vadd.f32 %v292, %v1560
    %1562 = vmatprep.mubr.bf16.mxu0 %v102
    %1563 = vmatmul.mubr.bf16.gmra.mxu0 %v101
    %v1564 = vpop.f32.mrf.mxu0
    %v1565 = vadd.f32 %v288, %v1564
    %v1566 = vpop.f32.mrf.mxu0
    %v1567 = vadd.f32 %v292, %v1566
    %v1568 = vpop.f32.mrf.mxu0
    %v1569 = vadd.f32 %v288, %v1568
    %v1570 = vpop.f32.mrf.mxu0
    %v1571 = vadd.f32 %v292, %v1570
    %1572 = vmatprep.mubr.bf16.mxu0 %v104
    %1573 = vmatmul.mubr.bf16.gmra.mxu0 %v103
    %v1574 = vpop.f32.mrf.mxu0
    %v1575 = vadd.f32 %v288, %v1574
    %v1576 = vpop.f32.mrf.mxu0
    %v1577 = vadd.f32 %v292, %v1576
    %v1578 = vpop.f32.mrf.mxu0
    %v1579 = vadd.f32 %v288, %v1578
    %v1580 = vpop.f32.mrf.mxu0
    %v1581 = vadd.f32 %v292, %v1580
    %1582 = vmatprep.mubr.bf16.mxu0 %v106
    %1583 = vmatmul.mubr.bf16.gmra.mxu0 %v105
    %v1584 = vpop.f32.mrf.mxu0
    %v1585 = vadd.f32 %v288, %v1584
    %v1586 = vpop.f32.mrf.mxu0
    %v1587 = vadd.f32 %v292, %v1586
    %v1588 = vpop.f32.mrf.mxu0
    %v1589 = vadd.f32 %v288, %v1588
    %v1590 = vpop.f32.mrf.mxu0
    %v1591 = vadd.f32 %v292, %v1590
    %1592 = vmatprep.mubr.bf16.mxu0 %v108
    %1593 = vmatmul.mubr.bf16.gmra.mxu0 %v107
    %v1594 = vpop.f32.mrf.mxu0
    %v1595 = vadd.f32 %v288, %v1594
    %v1596 = vpop.f32.mrf.mxu0
    %v1597 = vadd.f32 %v292, %v1596
    %v1598 = vpop.f32.mrf.mxu0
    %v1599 = vadd.f32 %v288, %v1598
    %v1600 = vpop.f32.mrf.mxu0
    %v1601 = vadd.f32 %v292, %v1600
    %1602 = vmatprep.mubr.bf16.mxu0 %v110
    %1603 = vmatmul.mubr.bf16.gmra.mxu0 %v109
    %v1604 = vpop.f32.mrf.mxu0
    %v1605 = vadd.f32 %v288, %v1604
    %v1606 = vpop.f32.mrf.mxu0
    %v1607 = vadd.f32 %v292, %v1606
    %v1608 = vpop.f32.mrf.mxu0
    %v1609 = vadd.f32 %v288, %v1608
    %v1610 = vpop.f32.mrf.mxu0
    %v1611 = vadd.f32 %v292, %v1610
    %1612 = vmatprep.mubr.bf16.mxu0 %v112
    %1613 = vmatmul.mubr.bf16.gmra.mxu0 %v111
    %v1614 = vpop.f32.mrf.mxu0
    %v1615 = vadd.f32 %v288, %v1614
    %v1616 = vpop.f32.mrf.mxu0
    %v1617 = vadd.f32 %v292, %v1616
    %v1618 = vpop.f32.mrf.mxu0
    %v1619 = vadd.f32 %v288, %v1618
    %v1620 = vpop.f32.mrf.mxu0
    %v1621 = vadd.f32 %v292, %v1620
    %1622 = vmatprep.mubr.bf16.mxu0 %v114
    %1623 = vmatmul.mubr.bf16.gmra.mxu0 %v113
    %v1624 = vpop.f32.mrf.mxu0
    %v1625 = vadd.f32 %v288, %v1624
    %v1626 = vpop.f32.mrf.mxu0
    %v1627 = vadd.f32 %v292, %v1626
    %v1628 = vpop.f32.mrf.mxu0
    %v1629 = vadd.f32 %v288, %v1628
    %v1630 = vpop.f32.mrf.mxu0
    %v1631 = vadd.f32 %v292, %v1630
    %1632 = vmatprep.mubr.bf16.mxu0 %v116
    %1633 = vmatmul.mubr.bf16.gmra.mxu0 %v115
    %v1634 = vpop.f32.mrf.mxu0
    %v1635 = vadd.f32 %v288, %v1634
    %v1636 = vpop.f32.mrf.mxu0
    %v1637 = vadd.f32 %v292, %v1636
    %v1638 = vpop.f32.mrf.mxu0
    %v1639 = vadd.f32 %v288, %v1638
    %v1640 = vpop.f32.mrf.mxu0
    %v1641 = vadd.f32 %v292, %v1640
    %1642 = vmatprep.mubr.bf16.mxu0 %v118
    %1643 = vmatmul.mubr.bf16.gmra.mxu0 %v117
    %v1644 = vpop.f32.mrf.mxu0
    %v1645 = vadd.f32 %v288, %v1644
    %v1646 = vpop.f32.mrf.mxu0
    %v1647 = vadd.f32 %v292, %v1646
    %v1648 = vpop.f32.mrf.mxu0
    %v1649 = vadd.f32 %v288, %v1648
    %v1650 = vpop.f32.mrf.mxu0
    %v1651 = vadd.f32 %v292, %v1650
    %1652 = vmatprep.mubr.bf16.mxu0 %v120
    %1653 = vmatmul.mubr.bf16.gmra.mxu0 %v119
    %v1654 = vpop.f32.mrf.mxu0
    %v1655 = vadd.f32 %v288, %v1654
    %v1656 = vpop.f32.mrf.mxu0
    %v1657 = vadd.f32 %v292, %v1656
    %v1658 = vpop.f32.mrf.mxu0
    %v1659 = vadd.f32 %v288, %v1658
    %v1660 = vpop.f32.mrf.mxu0
    %v1661 = vadd.f32 %v292, %v1660
    %1662 = vmatprep.mubr.bf16.mxu0 %v122
    %1663 = vmatmul.mubr.bf16.gmra.mxu0 %v121
    %v1664 = vpop.f32.mrf.mxu0
    %v1665 = vadd.f32 %v288, %v1664
    %v1666 = vpop.f32.mrf.mxu0
    %v1667 = vadd.f32 %v292, %v1666
    %v1668 = vpop.f32.mrf.mxu0
    %v1669 = vadd.f32 %v288, %v1668
    %v1670 = vpop.f32.mrf.mxu0
    %v1671 = vadd.f32 %v292, %v1670
    %1672 = vmatprep.mubr.bf16.mxu0 %v124
    %1673 = vmatmul.mubr.bf16.gmra.mxu0 %v123
    %v1674 = vpop.f32.mrf.mxu0
    %v1675 = vadd.f32 %v288, %v1674
    %v1676 = vpop.f32.mrf.mxu0
    %v1677 = vadd.f32 %v292, %v1676
    %v1678 = vpop.f32.mrf.mxu0
    %v1679 = vadd.f32 %v288, %v1678
    %v1680 = vpop.f32.mrf.mxu0
    %v1681 = vadd.f32 %v292, %v1680
    %1682 = vmatprep.mubr.bf16.mxu0 %v126
    %1683 = vmatmul.mubr.bf16.gmra.mxu0 %v125
    %v1684 = vpop.f32.mrf.mxu0
    %v1685 = vadd.f32 %v288, %v1684
    %v1686 = vpop.f32.mrf.mxu0
    %v1687 = vadd.f32 %v292, %v1686
    %v1688 = vpop.f32.mrf.mxu0
    %v1689 = vadd.f32 %v288, %v1688
    %v1690 = vpop.f32.mrf.mxu0
    %v1691 = vadd.f32 %v292, %v1690
    %1692 = vmatprep.mubr.bf16.mxu0 %v128
    %1693 = vmatmul.mubr.bf16.gmra.mxu0 %v127
    %v1694 = vpop.f32.mrf.mxu0
    %v1695 = vadd.f32 %v288, %v1694
    %v1696 = vpop.f32.mrf.mxu0
    %v1697 = vadd.f32 %v292, %v1696
    %v1698 = vpop.f32.mrf.mxu0
    %v1699 = vadd.f32 %v288, %v1698
    %v1700 = vpop.f32.mrf.mxu0
    %v1701 = vadd.f32 %v292, %v1700
    %1702 = vmatprep.mubr.bf16.mxu0 %v130
    %1703 = vmatmul.mubr.bf16.gmra.mxu0 %v129
    %v1704 = vpop.f32.mrf.mxu0
    %v1705 = vadd.f32 %v288, %v1704
    %v1706 = vpop.f32.mrf.mxu0
    %v1707 = vadd.f32 %v292, %v1706
    %v1708 = vpop.f32.mrf.mxu0
    %v1709 = vadd.f32 %v288, %v1708
    %v1710 = vpop.f32.mrf.mxu0
    %v1711 = vadd.f32 %v292, %v1710
    %1712 = vdwg.mxu0
    %v1713 = vmax.f32 %v976, 0.0
    %v1714 = vmax.f32 %v978, 0.0
    %v1715 = vmax.f32 %v1169, 0.0
    %v1716 = vmax.f32 %v1171, 0.0
    %v1717 = vmax.f32 %v1362, 0.0
    %v1718 = vmax.f32 %v1364, 0.0
    %v1719 = vmax.f32 %v1555, 0.0
    %v1720 = vmax.f32 %v1557, 0.0
    %v1721 = vmax.f32 %v980, 0.0
    %v1722 = vmax.f32 %v982, 0.0
    %v1723 = vmax.f32 %v1173, 0.0
    %v1724 = vmax.f32 %v1175, 0.0
    %v1725 = vmax.f32 %v1366, 0.0
    %v1726 = vmax.f32 %v1368, 0.0
    %v1727 = vmax.f32 %v1559, 0.0
    %v1728 = vmax.f32 %v1561, 0.0
    %v1729 = vmax.f32 %v986, 0.0
    %v1730 = vmax.f32 %v988, 0.0
    %v1731 = vmax.f32 %v1179, 0.0
    %v1732 = vmax.f32 %v1181, 0.0
    %v1733 = vmax.f32 %v1372, 0.0
    %v1734 = vmax.f32 %v1374, 0.0
    %v1735 = vmax.f32 %v1565, 0.0
    %v1736 = vmax.f32 %v1567, 0.0
    %v1737 = vmax.f32 %v990, 0.0
    %v1738 = vmax.f32 %v992, 0.0
    %v1739 = vmax.f32 %v1183, 0.0
    %v1740 = vmax.f32 %v1185, 0.0
    %v1741 = vmax.f32 %v1376, 0.0
    %v1742 = vmax.f32 %v1378, 0.0
    %v1743 = vmax.f32 %v1569, 0.0
    %v1744 = vmax.f32 %v1571, 0.0
    %v1745 = vmax.f32 %v996, 0.0
    %v1746 = vmax.f32 %v998, 0.0
    %v1747 = vmax.f32 %v1189, 0.0
    %v1748 = vmax.f32 %v1191, 0.0
    %v1749 = vmax.f32 %v1382, 0.0
    %v1750 = vmax.f32 %v1384, 0.0
    %v1751 = vmax.f32 %v1575, 0.0
    %v1752 = vmax.f32 %v1577, 0.0
    %v1753 = vmax.f32 %v1000, 0.0
    %v1754 = vmax.f32 %v1002, 0.0
    %v1755 = vmax.f32 %v1193, 0.0
    %v1756 = vmax.f32 %v1195, 0.0
    %v1757 = vmax.f32 %v1386, 0.0
    %v1758 = vmax.f32 %v1388, 0.0
    %v1759 = vmax.f32 %v1579, 0.0
    %v1760 = vmax.f32 %v1581, 0.0
    %v1761 = vmax.f32 %v1006, 0.0
    %v1762 = vmax.f32 %v1008, 0.0
    %v1763 = vmax.f32 %v1199, 0.0
    %v1764 = vmax.f32 %v1201, 0.0
    %v1765 = vmax.f32 %v1392, 0.0
    %v1766 = vmax.f32 %v1394, 0.0
    %v1767 = vmax.f32 %v1585, 0.0
    %v1768 = vmax.f32 %v1587, 0.0
    %v1769 = vmax.f32 %v1010, 0.0
    %v1770 = vmax.f32 %v1012, 0.0
    %v1771 = vmax.f32 %v1203, 0.0
    %v1772 = vmax.f32 %v1205, 0.0
    %v1773 = vmax.f32 %v1396, 0.0
    %v1774 = vmax.f32 %v1398, 0.0
    %v1775 = vmax.f32 %v1589, 0.0
    %v1776 = vmax.f32 %v1591, 0.0
    %v1777 = vmax.f32 %v1016, 0.0
    %v1778 = vmax.f32 %v1018, 0.0
    %v1779 = vmax.f32 %v1209, 0.0
    %v1780 = vmax.f32 %v1211, 0.0
    %v1781 = vmax.f32 %v1402, 0.0
    %v1782 = vmax.f32 %v1404, 0.0
    %v1783 = vmax.f32 %v1595, 0.0
    %v1784 = vmax.f32 %v1597, 0.0
    %v1785 = vmax.f32 %v1020, 0.0
    %v1786 = vmax.f32 %v1022, 0.0
    %v1787 = vmax.f32 %v1213, 0.0
    %v1788 = vmax.f32 %v1215, 0.0
    %v1789 = vmax.f32 %v1406, 0.0
    %v1790 = vmax.f32 %v1408, 0.0
    %v1791 = vmax.f32 %v1599, 0.0
    %v1792 = vmax.f32 %v1601, 0.0
    %v1793 = vmax.f32 %v1026, 0.0
    %v1794 = vmax.f32 %v1028, 0.0
    %v1795 = vmax.f32 %v1219, 0.0
    %v1796 = vmax.f32 %v1221, 0.0
    %v1797 = vmax.f32 %v1412, 0.0
    %v1798 = vmax.f32 %v1414, 0.0
    %v1799 = vmax.f32 %v1605, 0.0
    %v1800 = vmax.f32 %v1607, 0.0
    %v1801 = vmax.f32 %v1030, 0.0
    %v1802 = vmax.f32 %v1032, 0.0
    %v1803 = vmax.f32 %v1223, 0.0
    %v1804 = vmax.f32 %v1225, 0.0
    %v1805 = vmax.f32 %v1416, 0.0
    %v1806 = vmax.f32 %v1418, 0.0
    %v1807 = vmax.f32 %v1609, 0.0
    %v1808 = vmax.f32 %v1611, 0.0
    %v1809 = vmax.f32 %v1036, 0.0
    %v1810 = vmax.f32 %v1038, 0.0
    %v1811 = vmax.f32 %v1229, 0.0
    %v1812 = vmax.f32 %v1231, 0.0
    %v1813 = vmax.f32 %v1422, 0.0
    %v1814 = vmax.f32 %v1424, 0.0
    %v1815 = vmax.f32 %v1615, 0.0
    %v1816 = vmax.f32 %v1617, 0.0
    %v1817 = vmax.f32 %v1040, 0.0
    %v1818 = vmax.f32 %v1042, 0.0
    %v1819 = vmax.f32 %v1233, 0.0
    %v1820 = vmax.f32 %v1235, 0.0
    %v1821 = vmax.f32 %v1426, 0.0
    %v1822 = vmax.f32 %v1428, 0.0
    %v1823 = vmax.f32 %v1619, 0.0
    %v1824 = vmax.f32 %v1621, 0.0
    %v1825 = vmax.f32 %v1046, 0.0
    %v1826 = vmax.f32 %v1048, 0.0
    %v1827 = vmax.f32 %v1239, 0.0
    %v1828 = vmax.f32 %v1241, 0.0
    %v1829 = vmax.f32 %v1432, 0.0
    %v1830 = vmax.f32 %v1434, 0.0
    %v1831 = vmax.f32 %v1625, 0.0
    %v1832 = vmax.f32 %v1627, 0.0
    %v1833 = vmax.f32 %v1050, 0.0
    %v1834 = vmax.f32 %v1052, 0.0
    %v1835 = vmax.f32 %v1243, 0.0
    %v1836 = vmax.f32 %v1245, 0.0
    %v1837 = vmax.f32 %v1436, 0.0
    %v1838 = vmax.f32 %v1438, 0.0
    %v1839 = vmax.f32 %v1629, 0.0
    %v1840 = vmax.f32 %v1631, 0.0
    %v1841 = vmax.f32 %v1056, 0.0
    %v1842 = vmax.f32 %v1058, 0.0
    %v1843 = vmax.f32 %v1249, 0.0
    %v1844 = vmax.f32 %v1251, 0.0
    %v1845 = vmax.f32 %v1442, 0.0
    %v1846 = vmax.f32 %v1444, 0.0
    %v1847 = vmax.f32 %v1635, 0.0
    %v1848 = vmax.f32 %v1637, 0.0
    %v1849 = vmax.f32 %v1060, 0.0
    %v1850 = vmax.f32 %v1062, 0.0
    %v1851 = vmax.f32 %v1253, 0.0
    %v1852 = vmax.f32 %v1255, 0.0
    %v1853 = vmax.f32 %v1446, 0.0
    %v1854 = vmax.f32 %v1448, 0.0
    %v1855 = vmax.f32 %v1639, 0.0
    %v1856 = vmax.f32 %v1641, 0.0
    %v1857 = vmax.f32 %v1066, 0.0
    %v1858 = vmax.f32 %v1068, 0.0
    %v1859 = vmax.f32 %v1259, 0.0
    %v1860 = vmax.f32 %v1261, 0.0
    %v1861 = vmax.f32 %v1452, 0.0
    %v1862 = vmax.f32 %v1454, 0.0
    %v1863 = vmax.f32 %v1645, 0.0
    %v1864 = vmax.f32 %v1647, 0.0
    %v1865 = vmax.f32 %v1070, 0.0
    %v1866 = vmax.f32 %v1072, 0.0
    %v1867 = vmax.f32 %v1263, 0.0
    %v1868 = vmax.f32 %v1265, 0.0
    %v1869 = vmax.f32 %v1456, 0.0
    %v1870 = vmax.f32 %v1458, 0.0
    %v1871 = vmax.f32 %v1649, 0.0
    %v1872 = vmax.f32 %v1651, 0.0
    %v1873 = vmax.f32 %v1076, 0.0
    %v1874 = vmax.f32 %v1078, 0.0
    %v1875 = vmax.f32 %v1269, 0.0
    %v1876 = vmax.f32 %v1271, 0.0
    %v1877 = vmax.f32 %v1462, 0.0
    %v1878 = vmax.f32 %v1464, 0.0
    %v1879 = vmax.f32 %v1655, 0.0
    %v1880 = vmax.f32 %v1657, 0.0
    %v1881 = vmax.f32 %v1080, 0.0
    %v1882 = vmax.f32 %v1082, 0.0
    %v1883 = vmax.f32 %v1273, 0.0
    %v1884 = vmax.f32 %v1275, 0.0
    %v1885 = vmax.f32 %v1466, 0.0
    %v1886 = vmax.f32 %v1468, 0.0
    %v1887 = vmax.f32 %v1659, 0.0
    %v1888 = vmax.f32 %v1661, 0.0
    %v1889 = vmax.f32 %v1086, 0.0
    %v1890 = vmax.f32 %v1088, 0.0
    %v1891 = vmax.f32 %v1279, 0.0
    %v1892 = vmax.f32 %v1281, 0.0
    %v1893 = vmax.f32 %v1472, 0.0
    %v1894 = vmax.f32 %v1474, 0.0
    %v1895 = vmax.f32 %v1665, 0.0
    %v1896 = vmax.f32 %v1667, 0.0
    %v1897 = vmax.f32 %v1090, 0.0
    %v1898 = vmax.f32 %v1092, 0.0
    %v1899 = vmax.f32 %v1283, 0.0
    %v1900 = vmax.f32 %v1285, 0.0
    %v1901 = vmax.f32 %v1476, 0.0
    %v1902 = vmax.f32 %v1478, 0.0
    %v1903 = vmax.f32 %v1669, 0.0
    %v1904 = vmax.f32 %v1671, 0.0
    %v1905 = vmax.f32 %v1096, 0.0
    %v1906 = vmax.f32 %v1098, 0.0
    %v1907 = vmax.f32 %v1289, 0.0
    %v1908 = vmax.f32 %v1291, 0.0
    %v1909 = vmax.f32 %v1482, 0.0
    %v1910 = vmax.f32 %v1484, 0.0
    %v1911 = vmax.f32 %v1675, 0.0
    %v1912 = vmax.f32 %v1677, 0.0
    %v1913 = vmax.f32 %v1100, 0.0
    %v1914 = vmax.f32 %v1102, 0.0
    %v1915 = vmax.f32 %v1293, 0.0
    %v1916 = vmax.f32 %v1295, 0.0
    %v1917 = vmax.f32 %v1486, 0.0
    %v1918 = vmax.f32 %v1488, 0.0
    %v1919 = vmax.f32 %v1679, 0.0
    %v1920 = vmax.f32 %v1681, 0.0
    %v1921 = vmax.f32 %v1106, 0.0
    %v1922 = vmax.f32 %v1108, 0.0
    %v1923 = vmax.f32 %v1299, 0.0
    %v1924 = vmax.f32 %v1301, 0.0
    %v1925 = vmax.f32 %v1492, 0.0
    %v1926 = vmax.f32 %v1494, 0.0
    %v1927 = vmax.f32 %v1685, 0.0
    %v1928 = vmax.f32 %v1687, 0.0
    %v1929 = vmax.f32 %v1110, 0.0
    %v1930 = vmax.f32 %v1112, 0.0
    %v1931 = vmax.f32 %v1303, 0.0
    %v1932 = vmax.f32 %v1305, 0.0
    %v1933 = vmax.f32 %v1496, 0.0
    %v1934 = vmax.f32 %v1498, 0.0
    %v1935 = vmax.f32 %v1689, 0.0
    %v1936 = vmax.f32 %v1691, 0.0
    %v1937 = vmax.f32 %v1116, 0.0
    %v1938 = vmax.f32 %v1118, 0.0
    %v1939 = vmax.f32 %v1309, 0.0
    %v1940 = vmax.f32 %v1311, 0.0
    %v1941 = vmax.f32 %v1502, 0.0
    %v1942 = vmax.f32 %v1504, 0.0
    %v1943 = vmax.f32 %v1695, 0.0
    %v1944 = vmax.f32 %v1697, 0.0
    %v1945 = vmax.f32 %v1120, 0.0
    %v1946 = vmax.f32 %v1122, 0.0
    %v1947 = vmax.f32 %v1313, 0.0
    %v1948 = vmax.f32 %v1315, 0.0
    %v1949 = vmax.f32 %v1506, 0.0
    %v1950 = vmax.f32 %v1508, 0.0
    %v1951 = vmax.f32 %v1699, 0.0
    %v1952 = vmax.f32 %v1701, 0.0
    %v1953 = vmax.f32 %v1126, 0.0
    %v1954 = vmax.f32 %v1128, 0.0
    %v1955 = vmax.f32 %v1319, 0.0
    %v1956 = vmax.f32 %v1321, 0.0
    %v1957 = vmax.f32 %v1512, 0.0
    %v1958 = vmax.f32 %v1514, 0.0
    %v1959 = vmax.f32 %v1705, 0.0
    %v1960 = vmax.f32 %v1707, 0.0
    %v1961 = vmax.f32 %v1130, 0.0
    %v1962 = vmax.f32 %v1132, 0.0
    %v1963 = vmax.f32 %v1323, 0.0
    %v1964 = vmax.f32 %v1325, 0.0
    %v1965 = vmax.f32 %v1516, 0.0
    %v1966 = vmax.f32 %v1518, 0.0
    %v1967 = vmax.f32 %v1709, 0.0
    %v1968 = vmax.f32 %v1711, 0.0
    %v1969 = vpack.c.bf16 %v1721, %v1713
    %v1970 = vpack.c.bf16 %v1722, %v1714
    %v1971 = vpack.c.bf16 %v1723, %v1715
    %v1972 = vpack.c.bf16 %v1724, %v1716
    %v1973 = vpack.c.bf16 %v1725, %v1717
    %v1974 = vpack.c.bf16 %v1726, %v1718
    %v1975 = vpack.c.bf16 %v1727, %v1719
    %v1976 = vpack.c.bf16 %v1728, %v1720
    %v1977 = vpack.c.bf16 %v1737, %v1729
    %v1978 = vpack.c.bf16 %v1738, %v1730
    %v1979 = vpack.c.bf16 %v1739, %v1731
    %v1980 = vpack.c.bf16 %v1740, %v1732
    %v1981 = vpack.c.bf16 %v1741, %v1733
    %v1982 = vpack.c.bf16 %v1742, %v1734
    %v1983 = vpack.c.bf16 %v1743, %v1735
    %v1984 = vpack.c.bf16 %v1744, %v1736
    %v1985 = vpack.c.bf16 %v1753, %v1745
    %v1986 = vpack.c.bf16 %v1754, %v1746
    %v1987 = vpack.c.bf16 %v1755, %v1747
    %v1988 = vpack.c.bf16 %v1756, %v1748
    %v1989 = vpack.c.bf16 %v1757, %v1749
    %v1990 = vpack.c.bf16 %v1758, %v1750
    %v1991 = vpack.c.bf16 %v1759, %v1751
    %v1992 = vpack.c.bf16 %v1760, %v1752
    %v1993 = vpack.c.bf16 %v1769, %v1761
    %v1994 = vpack.c.bf16 %v1770, %v1762
    %v1995 = vpack.c.bf16 %v1771, %v1763
    %v1996 = vpack.c.bf16 %v1772, %v1764
    %v1997 = vpack.c.bf16 %v1773, %v1765
    %v1998 = vpack.c.bf16 %v1774, %v1766
    %v1999 = vpack.c.bf16 %v1775, %v1767
    %v2000 = vpack.c.bf16 %v1776, %v1768
    %v2001 = vpack.c.bf16 %v1785, %v1777
    %v2002 = vpack.c.bf16 %v1786, %v1778
    %v2003 = vpack.c.bf16 %v1787, %v1779
    %v2004 = vpack.c.bf16 %v1788, %v1780
    %v2005 = vpack.c.bf16 %v1789, %v1781
    %v2006 = vpack.c.bf16 %v1790, %v1782
    %v2007 = vpack.c.bf16 %v1791, %v1783
    %v2008 = vpack.c.bf16 %v1792, %v1784
    %v2009 = vpack.c.bf16 %v1801, %v1793
    %v2010 = vpack.c.bf16 %v1802, %v1794
    %v2011 = vpack.c.bf16 %v1803, %v1795
    %v2012 = vpack.c.bf16 %v1804, %v1796
    %v2013 = vpack.c.bf16 %v1805, %v1797
    %v2014 = vpack.c.bf16 %v1806, %v1798
    %v2015 = vpack.c.bf16 %v1807, %v1799
    %v2016 = vpack.c.bf16 %v1808, %v1800
    %v2017 = vpack.c.bf16 %v1817, %v1809
    %v2018 = vpack.c.bf16 %v1818, %v1810
    %v2019 = vpack.c.bf16 %v1819, %v1811
    %v2020 = vpack.c.bf16 %v1820, %v1812
    %v2021 = vpack.c.bf16 %v1821, %v1813
    %v2022 = vpack.c.bf16 %v1822, %v1814
    %v2023 = vpack.c.bf16 %v1823, %v1815
    %v2024 = vpack.c.bf16 %v1824, %v1816
    %v2025 = vpack.c.bf16 %v1833, %v1825
    %v2026 = vpack.c.bf16 %v1834, %v1826
    %v2027 = vpack.c.bf16 %v1835, %v1827
    %v2028 = vpack.c.bf16 %v1836, %v1828
    %v2029 = vpack.c.bf16 %v1837, %v1829
    %v2030 = vpack.c.bf16 %v1838, %v1830
    %v2031 = vpack.c.bf16 %v1839, %v1831
    %v2032 = vpack.c.bf16 %v1840, %v1832
    %v2033 = vpack.c.bf16 %v1849, %v1841
    %v2034 = vpack.c.bf16 %v1850, %v1842
    %v2035 = vpack.c.bf16 %v1851, %v1843
    %v2036 = vpack.c.bf16 %v1852, %v1844
    %v2037 = vpack.c.bf16 %v1853, %v1845
    %v2038 = vpack.c.bf16 %v1854, %v1846
    %v2039 = vpack.c.bf16 %v1855, %v1847
    %v2040 = vpack.c.bf16 %v1856, %v1848
    %v2041 = vpack.c.bf16 %v1865, %v1857
    %v2042 = vpack.c.bf16 %v1866, %v1858
    %v2043 = vpack.c.bf16 %v1867, %v1859
    %v2044 = vpack.c.bf16 %v1868, %v1860
    %v2045 = vpack.c.bf16 %v1869, %v1861
    %v2046 = vpack.c.bf16 %v1870, %v1862
    %v2047 = vpack.c.bf16 %v1871, %v1863
    %v2048 = vpack.c.bf16 %v1872, %v1864
    %v2049 = vpack.c.bf16 %v1881, %v1873
    %v2050 = vpack.c.bf16 %v1882, %v1874
    %v2051 = vpack.c.bf16 %v1883, %v1875
    %v2052 = vpack.c.bf16 %v1884, %v1876
    %v2053 = vpack.c.bf16 %v1885, %v1877
    %v2054 = vpack.c.bf16 %v1886, %v1878
    %v2055 = vpack.c.bf16 %v1887, %v1879
    %v2056 = vpack.c.bf16 %v1888, %v1880
    %v2057 = vpack.c.bf16 %v1897, %v1889
    %v2058 = vpack.c.bf16 %v1898, %v1890
    %v2059 = vpack.c.bf16 %v1899, %v1891
    %v2060 = vpack.c.bf16 %v1900, %v1892
    %v2061 = vpack.c.bf16 %v1901, %v1893
    %v2062 = vpack.c.bf16 %v1902, %v1894
    %v2063 = vpack.c.bf16 %v1903, %v1895
    %v2064 = vpack.c.bf16 %v1904, %v1896
    %v2065 = vpack.c.bf16 %v1913, %v1905
    %v2066 = vpack.c.bf16 %v1914, %v1906
    %v2067 = vpack.c.bf16 %v1915, %v1907
    %v2068 = vpack.c.bf16 %v1916, %v1908
    %v2069 = vpack.c.bf16 %v1917, %v1909
    %v2070 = vpack.c.bf16 %v1918, %v1910
    %v2071 = vpack.c.bf16 %v1919, %v1911
    %v2072 = vpack.c.bf16 %v1920, %v1912
    %v2073 = vpack.c.bf16 %v1929, %v1921
    %v2074 = vpack.c.bf16 %v1930, %v1922
    %v2075 = vpack.c.bf16 %v1931, %v1923
    %v2076 = vpack.c.bf16 %v1932, %v1924
    %v2077 = vpack.c.bf16 %v1933, %v1925
    %v2078 = vpack.c.bf16 %v1934, %v1926
    %v2079 = vpack.c.bf16 %v1935, %v1927
    %v2080 = vpack.c.bf16 %v1936, %v1928
    %v2081 = vpack.c.bf16 %v1945, %v1937
    %v2082 = vpack.c.bf16 %v1946, %v1938
    %v2083 = vpack.c.bf16 %v1947, %v1939
    %v2084 = vpack.c.bf16 %v1948, %v1940
    %v2085 = vpack.c.bf16 %v1949, %v1941
    %v2086 = vpack.c.bf16 %v1950, %v1942
    %v2087 = vpack.c.bf16 %v1951, %v1943
    %v2088 = vpack.c.bf16 %v1952, %v1944
    %v2089 = vpack.c.bf16 %v1961, %v1953
    %v2090 = vpack.c.bf16 %v1962, %v1954
    %v2091 = vpack.c.bf16 %v1963, %v1955
    %v2092 = vpack.c.bf16 %v1964, %v1956
    %v2093 = vpack.c.bf16 %v1965, %v1957
    %v2094 = vpack.c.bf16 %v1966, %v1958
    %v2095 = vpack.c.bf16 %v1967, %v1959
    %v2096 = vpack.c.bf16 %v1968, %v1960
    %v2097 = vld [vmem:[%s3] sm:$0xf]
    %v2098 = vld [vmem:[%s3 + $0x4] sm:$0xf]
    %v2099 = vld [vmem:[%s3 + $0x8] sm:$0xf]
    %v2100 = vld [vmem:[%s3 + $0xc] sm:$0xf]
    %v2101 = vld [vmem:[%s3 + $0x10] sm:$0xf]
    %v2102 = vld [vmem:[%s3 + $0x14] sm:$0xf]
    %v2103 = vld [vmem:[%s3 + $0x18] sm:$0xf]
    %v2104 = vld [vmem:[%s3 + $0x1c] sm:$0xf]
    %v2105 = vld [vmem:[%s3 + $0x20] sm:$0xf]
    %v2106 = vld [vmem:[%s3 + $0x24] sm:$0xf]
    %v2107 = vld [vmem:[%s3 + $0x28] sm:$0xf]
    %v2108 = vld [vmem:[%s3 + $0x2c] sm:$0xf]
    %v2109 = vld [vmem:[%s3 + $0x30] sm:$0xf]
    %v2110 = vld [vmem:[%s3 + $0x34] sm:$0xf]
    %v2111 = vld [vmem:[%s3 + $0x38] sm:$0xf]
    %v2112 = vld [vmem:[%s3 + $0x3c] sm:$0xf]
    %v2113 = vld [vmem:[%s3 + $0x40] sm:$0xf]
    %v2114 = vld [vmem:[%s3 + $0x44] sm:$0xf]
    %v2115 = vld [vmem:[%s3 + $0x48] sm:$0xf]
    %v2116 = vld [vmem:[%s3 + $0x4c] sm:$0xf]
    %v2117 = vld [vmem:[%s3 + $0x50] sm:$0xf]
    %v2118 = vld [vmem:[%s3 + $0x54] sm:$0xf]
    %v2119 = vld [vmem:[%s3 + $0x58] sm:$0xf]
    %v2120 = vld [vmem:[%s3 + $0x5c] sm:$0xf]
    %v2121 = vld [vmem:[%s3 + $0x60] sm:$0xf]
    %v2122 = vld [vmem:[%s3 + $0x64] sm:$0xf]
    %v2123 = vld [vmem:[%s3 + $0x68] sm:$0xf]
    %v2124 = vld [vmem:[%s3 + $0x6c] sm:$0xf]
    %v2125 = vld [vmem:[%s3 + $0x70] sm:$0xf]
    %v2126 = vld [vmem:[%s3 + $0x74] sm:$0xf]
    %v2127 = vld [vmem:[%s3 + $0x78] sm:$0xf]
    %v2128 = vld [vmem:[%s3 + $0x7c] sm:$0xf]
    %v2129 = vld [vmem:[%s3 + $0x80] sm:$0xf]
    %v2130 = vld [vmem:[%s3 + $0x84] sm:$0xf]
    %v2131 = vld [vmem:[%s3 + $0x88] sm:$0xf]
    %v2132 = vld [vmem:[%s3 + $0x8c] sm:$0xf]
    %v2133 = vld [vmem:[%s3 + $0x90] sm:$0xf]
    %v2134 = vld [vmem:[%s3 + $0x94] sm:$0xf]
    %v2135 = vld [vmem:[%s3 + $0x98] sm:$0xf]
    %v2136 = vld [vmem:[%s3 + $0x9c] sm:$0xf]
    %v2137 = vld [vmem:[%s3 + $0xa0] sm:$0xf]
    %v2138 = vld [vmem:[%s3 + $0xa4] sm:$0xf]
    %v2139 = vld [vmem:[%s3 + $0xa8] sm:$0xf]
    %v2140 = vld [vmem:[%s3 + $0xac] sm:$0xf]
    %v2141 = vld [vmem:[%s3 + $0xb0] sm:$0xf]
    %v2142 = vld [vmem:[%s3 + $0xb4] sm:$0xf]
    %v2143 = vld [vmem:[%s3 + $0xb8] sm:$0xf]
    %v2144 = vld [vmem:[%s3 + $0xbc] sm:$0xf]
    %v2145 = vld [vmem:[%s3 + $0xc0] sm:$0xf]
    %v2146 = vld [vmem:[%s3 + $0xc4] sm:$0xf]
    %v2147 = vld [vmem:[%s3 + $0xc8] sm:$0xf]
    %v2148 = vld [vmem:[%s3 + $0xcc] sm:$0xf]
    %v2149 = vld [vmem:[%s3 + $0xd0] sm:$0xf]
    %v2150 = vld [vmem:[%s3 + $0xd4] sm:$0xf]
    %v2151 = vld [vmem:[%s3 + $0xd8] sm:$0xf]
    %v2152 = vld [vmem:[%s3 + $0xdc] sm:$0xf]
    %v2153 = vld [vmem:[%s3 + $0xe0] sm:$0xf]
    %v2154 = vld [vmem:[%s3 + $0xe4] sm:$0xf]
    %v2155 = vld [vmem:[%s3 + $0xe8] sm:$0xf]
    %v2156 = vld [vmem:[%s3 + $0xec] sm:$0xf]
    %v2157 = vld [vmem:[%s3 + $0xf0] sm:$0xf]
    %v2158 = vld [vmem:[%s3 + $0xf4] sm:$0xf]
    %v2159 = vld [vmem:[%s3 + $0xf8] sm:$0xf]
    %v2160 = vld [vmem:[%s3 + $0xfc] sm:$0xf]
    %v2161 = vld [vmem:[%s3 + $0x100] sm:$0xf]
    %v2162 = vld [vmem:[%s3 + $0x104] sm:$0xf]
    %v2163 = vld [vmem:[%s3 + $0x108] sm:$0xf]
    %v2164 = vld [vmem:[%s3 + $0x10c] sm:$0xf]
    %v2165 = vld [vmem:[%s3 + $0x110] sm:$0xf]
    %v2166 = vld [vmem:[%s3 + $0x114] sm:$0xf]
    %v2167 = vld [vmem:[%s3 + $0x118] sm:$0xf]
    %v2168 = vld [vmem:[%s3 + $0x11c] sm:$0xf]
    %v2169 = vld [vmem:[%s3 + $0x120] sm:$0xf]
    %v2170 = vld [vmem:[%s3 + $0x124] sm:$0xf]
    %v2171 = vld [vmem:[%s3 + $0x128] sm:$0xf]
    %v2172 = vld [vmem:[%s3 + $0x12c] sm:$0xf]
    %v2173 = vld [vmem:[%s3 + $0x130] sm:$0xf]
    %v2174 = vld [vmem:[%s3 + $0x134] sm:$0xf]
    %v2175 = vld [vmem:[%s3 + $0x138] sm:$0xf]
    %v2176 = vld [vmem:[%s3 + $0x13c] sm:$0xf]
    %v2177 = vld [vmem:[%s3 + $0x140] sm:$0xf]
    %v2178 = vld [vmem:[%s3 + $0x144] sm:$0xf]
    %v2179 = vld [vmem:[%s3 + $0x148] sm:$0xf]
    %v2180 = vld [vmem:[%s3 + $0x14c] sm:$0xf]
    %v2181 = vld [vmem:[%s3 + $0x150] sm:$0xf]
    %v2182 = vld [vmem:[%s3 + $0x154] sm:$0xf]
    %v2183 = vld [vmem:[%s3 + $0x158] sm:$0xf]
    %v2184 = vld [vmem:[%s3 + $0x15c] sm:$0xf]
    %v2185 = vld [vmem:[%s3 + $0x160] sm:$0xf]
    %v2186 = vld [vmem:[%s3 + $0x164] sm:$0xf]
    %v2187 = vld [vmem:[%s3 + $0x168] sm:$0xf]
    %v2188 = vld [vmem:[%s3 + $0x16c] sm:$0xf]
    %v2189 = vld [vmem:[%s3 + $0x170] sm:$0xf]
    %v2190 = vld [vmem:[%s3 + $0x174] sm:$0xf]
    %v2191 = vld [vmem:[%s3 + $0x178] sm:$0xf]
    %v2192 = vld [vmem:[%s3 + $0x17c] sm:$0xf]
    %v2193 = vld [vmem:[%s3 + $0x180] sm:$0xf]
    %v2194 = vld [vmem:[%s3 + $0x184] sm:$0xf]
    %v2195 = vld [vmem:[%s3 + $0x188] sm:$0xf]
    %v2196 = vld [vmem:[%s3 + $0x18c] sm:$0xf]
    %v2197 = vld [vmem:[%s3 + $0x190] sm:$0xf]
    %v2198 = vld [vmem:[%s3 + $0x194] sm:$0xf]
    %v2199 = vld [vmem:[%s3 + $0x198] sm:$0xf]
    %v2200 = vld [vmem:[%s3 + $0x19c] sm:$0xf]
    %v2201 = vld [vmem:[%s3 + $0x1a0] sm:$0xf]
    %v2202 = vld [vmem:[%s3 + $0x1a4] sm:$0xf]
    %v2203 = vld [vmem:[%s3 + $0x1a8] sm:$0xf]
    %v2204 = vld [vmem:[%s3 + $0x1ac] sm:$0xf]
    %v2205 = vld [vmem:[%s3 + $0x1b0] sm:$0xf]
    %v2206 = vld [vmem:[%s3 + $0x1b4] sm:$0xf]
    %v2207 = vld [vmem:[%s3 + $0x1b8] sm:$0xf]
    %v2208 = vld [vmem:[%s3 + $0x1bc] sm:$0xf]
    %v2209 = vld [vmem:[%s3 + $0x1c0] sm:$0xf]
    %v2210 = vld [vmem:[%s3 + $0x1c4] sm:$0xf]
    %v2211 = vld [vmem:[%s3 + $0x1c8] sm:$0xf]
    %v2212 = vld [vmem:[%s3 + $0x1cc] sm:$0xf]
    %v2213 = vld [vmem:[%s3 + $0x1d0] sm:$0xf]
    %v2214 = vld [vmem:[%s3 + $0x1d4] sm:$0xf]
    %v2215 = vld [vmem:[%s3 + $0x1d8] sm:$0xf]
    %v2216 = vld [vmem:[%s3 + $0x1dc] sm:$0xf]
    %v2217 = vld [vmem:[%s3 + $0x1e0] sm:$0xf]
    %v2218 = vld [vmem:[%s3 + $0x1e4] sm:$0xf]
    %v2219 = vld [vmem:[%s3 + $0x1e8] sm:$0xf]
    %v2220 = vld [vmem:[%s3 + $0x1ec] sm:$0xf]
    %v2221 = vld [vmem:[%s3 + $0x1f0] sm:$0xf]
    %v2222 = vld [vmem:[%s3 + $0x1f4] sm:$0xf]
    %v2223 = vld [vmem:[%s3 + $0x1f8] sm:$0xf]
    %v2224 = vld [vmem:[%s3 + $0x1fc] sm:$0xf]
    %v2225 = vld [vmem:[%s4] sm:$0x1]
    %v2227 = vlaneseq
    %v2228 = vshrl.u32 %v2227, 7
    %v2229 = vsub.s32 0, %v2228
    %v2230 = vrot.slane %v2225, %v2229
    %v2360 = vunpack.c.l.b16 %v2097
    %v2361 = vunpack.c.l.b16 %v2098
    %v2362 = vunpack.c.l.b16 %v2099
    %v2363 = vunpack.c.l.b16 %v2100
    %v2364 = vunpack.c.l.b16 %v2101
    %v2365 = vunpack.c.l.b16 %v2102
    %v2366 = vunpack.c.l.b16 %v2103
    %v2367 = vunpack.c.l.b16 %v2104
    %v2368 = vunpack.c.l.b16 %v2105
    %v2369 = vunpack.c.l.b16 %v2106
    %v2370 = vunpack.c.l.b16 %v2107
    %v2371 = vunpack.c.l.b16 %v2108
    %v2372 = vunpack.c.l.b16 %v2109
    %v2373 = vunpack.c.l.b16 %v2110
    %v2374 = vunpack.c.l.b16 %v2111
    %v2375 = vunpack.c.l.b16 %v2112
    %v2376 = vunpack.c.l.b16 %v2113
    %v2377 = vunpack.c.l.b16 %v2114
    %v2378 = vunpack.c.l.b16 %v2115
    %v2379 = vunpack.c.l.b16 %v2116
    %v2380 = vunpack.c.l.b16 %v2117
    %v2381 = vunpack.c.l.b16 %v2118
    %v2382 = vunpack.c.l.b16 %v2119
    %v2383 = vunpack.c.l.b16 %v2120
    %v2384 = vunpack.c.l.b16 %v2121
    %v2385 = vunpack.c.l.b16 %v2122
    %v2386 = vunpack.c.l.b16 %v2123
    %v2387 = vunpack.c.l.b16 %v2124
    %v2388 = vunpack.c.l.b16 %v2125
    %v2389 = vunpack.c.l.b16 %v2126
    %v2390 = vunpack.c.l.b16 %v2127
    %v2391 = vunpack.c.l.b16 %v2128
    %v2392 = vunpack.c.l.b16 %v2129
    %v2393 = vunpack.c.l.b16 %v2130
    %v2394 = vunpack.c.l.b16 %v2131
    %v2395 = vunpack.c.l.b16 %v2132
    %v2396 = vunpack.c.l.b16 %v2133
    %v2397 = vunpack.c.l.b16 %v2134
    %v2398 = vunpack.c.l.b16 %v2135
    %v2399 = vunpack.c.l.b16 %v2136
    %v2400 = vunpack.c.l.b16 %v2137
    %v2401 = vunpack.c.l.b16 %v2138
    %v2402 = vunpack.c.l.b16 %v2139
    %v2403 = vunpack.c.l.b16 %v2140
    %v2404 = vunpack.c.l.b16 %v2141
    %v2405 = vunpack.c.l.b16 %v2142
    %v2406 = vunpack.c.l.b16 %v2143
    %v2407 = vunpack.c.l.b16 %v2144
    %v2408 = vunpack.c.l.b16 %v2145
    %v2409 = vunpack.c.l.b16 %v2146
    %v2410 = vunpack.c.l.b16 %v2147
    %v2411 = vunpack.c.l.b16 %v2148
    %v2412 = vunpack.c.l.b16 %v2149
    %v2413 = vunpack.c.l.b16 %v2150
    %v2414 = vunpack.c.l.b16 %v2151
    %v2415 = vunpack.c.l.b16 %v2152
    %v2416 = vunpack.c.l.b16 %v2153
    %v2417 = vunpack.c.l.b16 %v2154
    %v2418 = vunpack.c.l.b16 %v2155
    %v2419 = vunpack.c.l.b16 %v2156
    %v2420 = vunpack.c.l.b16 %v2157
    %v2421 = vunpack.c.l.b16 %v2158
    %v2422 = vunpack.c.l.b16 %v2159
    %v2423 = vunpack.c.l.b16 %v2160
    %v2424 = vunpack.c.l.b16 %v2161
    %v2425 = vunpack.c.l.b16 %v2162
    %v2426 = vunpack.c.l.b16 %v2163
    %v2427 = vunpack.c.l.b16 %v2164
    %v2428 = vunpack.c.l.b16 %v2165
    %v2429 = vunpack.c.l.b16 %v2166
    %v2430 = vunpack.c.l.b16 %v2167
    %v2431 = vunpack.c.l.b16 %v2168
    %v2432 = vunpack.c.l.b16 %v2169
    %v2433 = vunpack.c.l.b16 %v2170
    %v2434 = vunpack.c.l.b16 %v2171
    %v2435 = vunpack.c.l.b16 %v2172
    %v2436 = vunpack.c.l.b16 %v2173
    %v2437 = vunpack.c.l.b16 %v2174
    %v2438 = vunpack.c.l.b16 %v2175
    %v2439 = vunpack.c.l.b16 %v2176
    %v2440 = vunpack.c.l.b16 %v2177
    %v2441 = vunpack.c.l.b16 %v2178
    %v2442 = vunpack.c.l.b16 %v2179
    %v2443 = vunpack.c.l.b16 %v2180
    %v2444 = vunpack.c.l.b16 %v2181
    %v2445 = vunpack.c.l.b16 %v2182
    %v2446 = vunpack.c.l.b16 %v2183
    %v2447 = vunpack.c.l.b16 %v2184
    %v2448 = vunpack.c.l.b16 %v2185
    %v2449 = vunpack.c.l.b16 %v2186
    %v2450 = vunpack.c.l.b16 %v2187
    %v2451 = vunpack.c.l.b16 %v2188
    %v2452 = vunpack.c.l.b16 %v2189
    %v2453 = vunpack.c.l.b16 %v2190
    %v2454 = vunpack.c.l.b16 %v2191
    %v2455 = vunpack.c.l.b16 %v2192
    %v2456 = vunpack.c.l.b16 %v2193
    %v2457 = vunpack.c.l.b16 %v2194
    %v2458 = vunpack.c.l.b16 %v2195
    %v2459 = vunpack.c.l.b16 %v2196
    %v2460 = vunpack.c.l.b16 %v2197
    %v2461 = vunpack.c.l.b16 %v2198
    %v2462 = vunpack.c.l.b16 %v2199
    %v2463 = vunpack.c.l.b16 %v2200
    %v2464 = vunpack.c.l.b16 %v2201
    %v2465 = vunpack.c.l.b16 %v2202
    %v2466 = vunpack.c.l.b16 %v2203
    %v2467 = vunpack.c.l.b16 %v2204
    %v2468 = vunpack.c.l.b16 %v2205
    %v2469 = vunpack.c.l.b16 %v2206
    %v2470 = vunpack.c.l.b16 %v2207
    %v2471 = vunpack.c.l.b16 %v2208
    %v2472 = vunpack.c.l.b16 %v2209
    %v2473 = vunpack.c.l.b16 %v2210
    %v2474 = vunpack.c.l.b16 %v2211
    %v2475 = vunpack.c.l.b16 %v2212
    %v2476 = vunpack.c.l.b16 %v2213
    %v2477 = vunpack.c.l.b16 %v2214
    %v2478 = vunpack.c.l.b16 %v2215
    %v2479 = vunpack.c.l.b16 %v2216
    %v2480 = vunpack.c.l.b16 %v2217
    %v2481 = vunpack.c.l.b16 %v2218
    %v2482 = vunpack.c.l.b16 %v2219
    %v2483 = vunpack.c.l.b16 %v2220
    %v2484 = vunpack.c.l.b16 %v2221
    %v2485 = vunpack.c.l.b16 %v2222
    %v2486 = vunpack.c.l.b16 %v2223
    %v2487 = vunpack.c.l.b16 %v2224
    %v2488 = vpack.c.b16 %v2361, %v2360
    %v2489 = vpack.c.b16 %v2363, %v2362
    %v2490 = vpack.c.b16 %v2365, %v2364
    %v2491 = vpack.c.b16 %v2367, %v2366
    %v2492 = vpack.c.b16 %v2369, %v2368
    %v2493 = vpack.c.b16 %v2371, %v2370
    %v2494 = vpack.c.b16 %v2373, %v2372
    %v2495 = vpack.c.b16 %v2375, %v2374
    %v2496 = vpack.c.b16 %v2377, %v2376
    %v2497 = vpack.c.b16 %v2379, %v2378
    %v2498 = vpack.c.b16 %v2381, %v2380
    %v2499 = vpack.c.b16 %v2383, %v2382
    %v2500 = vpack.c.b16 %v2385, %v2384
    %v2501 = vpack.c.b16 %v2387, %v2386
    %v2502 = vpack.c.b16 %v2389, %v2388
    %v2503 = vpack.c.b16 %v2391, %v2390
    %v2504 = vpack.c.b16 %v2393, %v2392
    %v2505 = vpack.c.b16 %v2395, %v2394
    %v2506 = vpack.c.b16 %v2397, %v2396
    %v2507 = vpack.c.b16 %v2399, %v2398
    %v2508 = vpack.c.b16 %v2401, %v2400
    %v2509 = vpack.c.b16 %v2403, %v2402
    %v2510 = vpack.c.b16 %v2405, %v2404
    %v2511 = vpack.c.b16 %v2407, %v2406
    %v2512 = vpack.c.b16 %v2409, %v2408
    %v2513 = vpack.c.b16 %v2411, %v2410
    %v2514 = vpack.c.b16 %v2413, %v2412
    %v2515 = vpack.c.b16 %v2415, %v2414
    %v2516 = vpack.c.b16 %v2417, %v2416
    %v2517 = vpack.c.b16 %v2419, %v2418
    %v2518 = vpack.c.b16 %v2421, %v2420
    %v2519 = vpack.c.b16 %v2423, %v2422
    %v2520 = vpack.c.b16 %v2425, %v2424
    %v2521 = vpack.c.b16 %v2427, %v2426
    %v2522 = vpack.c.b16 %v2429, %v2428
    %v2523 = vpack.c.b16 %v2431, %v2430
    %v2524 = vpack.c.b16 %v2433, %v2432
    %v2525 = vpack.c.b16 %v2435, %v2434
    %v2526 = vpack.c.b16 %v2437, %v2436
    %v2527 = vpack.c.b16 %v2439, %v2438
    %v2528 = vpack.c.b16 %v2441, %v2440
    %v2529 = vpack.c.b16 %v2443, %v2442
    %v2530 = vpack.c.b16 %v2445, %v2444
    %v2531 = vpack.c.b16 %v2447, %v2446
    %v2532 = vpack.c.b16 %v2449, %v2448
    %v2533 = vpack.c.b16 %v2451, %v2450
    %v2534 = vpack.c.b16 %v2453, %v2452
    %v2535 = vpack.c.b16 %v2455, %v2454
    %v2536 = vpack.c.b16 %v2457, %v2456
    %v2537 = vpack.c.b16 %v2459, %v2458
    %v2538 = vpack.c.b16 %v2461, %v2460
    %v2539 = vpack.c.b16 %v2463, %v2462
    %v2540 = vpack.c.b16 %v2465, %v2464
    %v2541 = vpack.c.b16 %v2467, %v2466
    %v2542 = vpack.c.b16 %v2469, %v2468
    %v2543 = vpack.c.b16 %v2471, %v2470
    %v2544 = vpack.c.b16 %v2473, %v2472
    %v2545 = vpack.c.b16 %v2475, %v2474
    %v2546 = vpack.c.b16 %v2477, %v2476
    %v2547 = vpack.c.b16 %v2479, %v2478
    %v2548 = vpack.c.b16 %v2481, %v2480
    %v2549 = vpack.c.b16 %v2483, %v2482
    %v2550 = vpack.c.b16 %v2485, %v2484
    %v2551 = vpack.c.b16 %v2487, %v2486
    %2616 = vmatprep.subr.bf16.mxu0 0
    %2617 = vmatpush1.bf16.msra.mxu0 %v2495
    %2618 = vmatprep.subr.bf16.mxu0 0
    %2619 = vmatpush1.bf16.msra.mxu0 %v2494
    %2620 = vmatprep.subr.bf16.mxu0 0
    %2621 = vmatpush1.bf16.msra.mxu0 %v2493
    %2622 = vmatprep.subr.bf16.mxu0 0
    %2623 = vmatpush1.bf16.msra.mxu0 %v2492
    %2624 = vmatprep.subr.bf16.mxu0 0
    %2625 = vmatpush1.bf16.msra.mxu0 %v2491
    %2626 = vmatprep.subr.bf16.mxu0 0
    %2627 = vmatpush1.bf16.msra.mxu0 %v2490
    %2628 = vmatprep.subr.bf16.mxu0 0
    %2629 = vmatpush1.bf16.msra.mxu0 %v2489
    %2630 = vmatprep.subr.bf16.mxu0 0
    %2631 = vmatpush1.bf16.msra.mxu0 %v2488
    %2632 = vmatprep.subr.bf16.mxu0 0
    %2633 = vmatpush2.bf16.msra.mxu0 %v2503
    %2634 = vmatprep.subr.bf16.mxu0 0
    %2635 = vmatpush2.bf16.msra.mxu0 %v2502
    %2636 = vmatprep.subr.bf16.mxu0 0
    %2637 = vmatpush2.bf16.msra.mxu0 %v2501
    %2638 = vmatprep.subr.bf16.mxu0 0
    %2639 = vmatpush2.bf16.msra.mxu0 %v2500
    %2640 = vmatprep.subr.bf16.mxu0 0
    %2641 = vmatpush2.bf16.msra.mxu0 %v2499
    %2642 = vmatprep.subr.bf16.mxu0 0
    %2643 = vmatpush2.bf16.msra.mxu0 %v2498
    %2644 = vmatprep.subr.bf16.mxu0 0
    %2645 = vmatpush2.bf16.msra.mxu0 %v2497
    %2646 = vmatprep.subr.bf16.mxu0 0
    %2647 = vmatpush2.bf16.msra.mxu0 %v2496
    %2648 = vmatprep.mubr.bf16.mxu0 %v1970
    %2649 = vmatmul.mubr.bf16.gmra.mxu0 %v1969
    %v2650 = vpop.f32.mrf.mxu0
    %v2651 = vadd.f32 %v2230, %v2650
    %v2652 = vpop.f32.mrf.mxu0
    %v2653 = vpop.f32.mrf.mxu0
    %v2654 = vadd.f32 %v2230, %v2653
    %v2655 = vpop.f32.mrf.mxu0
    %2656 = vmatprep.mubr.bf16.mxu0 %v1978
    %2657 = vmatmul.mubr.bf16.gmra.mxu0 %v1977
    %v2658 = vpop.f32.mrf.mxu0
    %v2659 = vadd.f32 %v2230, %v2658
    %v2660 = vpop.f32.mrf.mxu0
    %v2661 = vpop.f32.mrf.mxu0
    %v2662 = vadd.f32 %v2230, %v2661
    %v2663 = vpop.f32.mrf.mxu0
    %2664 = vmatprep.mubr.bf16.mxu0 %v1986
    %2665 = vmatmul.mubr.bf16.gmra.mxu0 %v1985
    %v2666 = vpop.f32.mrf.mxu0
    %v2667 = vadd.f32 %v2230, %v2666
    %v2668 = vpop.f32.mrf.mxu0
    %v2669 = vpop.f32.mrf.mxu0
    %v2670 = vadd.f32 %v2230, %v2669
    %v2671 = vpop.f32.mrf.mxu0
    %2672 = vmatprep.mubr.bf16.mxu0 %v1994
    %2673 = vmatmul.mubr.bf16.gmra.mxu0 %v1993
    %v2674 = vpop.f32.mrf.mxu0
    %v2675 = vadd.f32 %v2230, %v2674
    %v2676 = vpop.f32.mrf.mxu0
    %v2677 = vpop.f32.mrf.mxu0
    %v2678 = vadd.f32 %v2230, %v2677
    %v2679 = vpop.f32.mrf.mxu0
    %2680 = vmatprep.mubr.bf16.mxu0 %v2002
    %2681 = vmatmul.mubr.bf16.gmra.mxu0 %v2001
    %v2682 = vpop.f32.mrf.mxu0
    %v2683 = vadd.f32 %v2230, %v2682
    %v2684 = vpop.f32.mrf.mxu0
    %v2685 = vpop.f32.mrf.mxu0
    %v2686 = vadd.f32 %v2230, %v2685
    %v2687 = vpop.f32.mrf.mxu0
    %2688 = vmatprep.mubr.bf16.mxu0 %v2010
    %2689 = vmatmul.mubr.bf16.gmra.mxu0 %v2009
    %v2690 = vpop.f32.mrf.mxu0
    %v2691 = vadd.f32 %v2230, %v2690
    %v2692 = vpop.f32.mrf.mxu0
    %v2693 = vpop.f32.mrf.mxu0
    %v2694 = vadd.f32 %v2230, %v2693
    %v2695 = vpop.f32.mrf.mxu0
    %2696 = vmatprep.mubr.bf16.mxu0 %v2018
    %2697 = vmatmul.mubr.bf16.gmra.mxu0 %v2017
    %v2698 = vpop.f32.mrf.mxu0
    %v2699 = vadd.f32 %v2230, %v2698
    %v2700 = vpop.f32.mrf.mxu0
    %v2701 = vpop.f32.mrf.mxu0
    %v2702 = vadd.f32 %v2230, %v2701
    %v2703 = vpop.f32.mrf.mxu0
    %2704 = vmatprep.mubr.bf16.mxu0 %v2026
    %2705 = vmatmul.mubr.bf16.gmra.mxu0 %v2025
    %v2706 = vpop.f32.mrf.mxu0
    %v2707 = vadd.f32 %v2230, %v2706
    %v2708 = vpop.f32.mrf.mxu0
    %v2709 = vpop.f32.mrf.mxu0
    %v2710 = vadd.f32 %v2230, %v2709
    %v2711 = vpop.f32.mrf.mxu0
    %2712 = vmatprep.mubr.bf16.mxu0 %v2034
    %2713 = vmatmul.mubr.bf16.gmra.mxu0 %v2033
    %v2714 = vpop.f32.mrf.mxu0
    %v2715 = vadd.f32 %v2230, %v2714
    %v2716 = vpop.f32.mrf.mxu0
    %v2717 = vpop.f32.mrf.mxu0
    %v2718 = vadd.f32 %v2230, %v2717
    %v2719 = vpop.f32.mrf.mxu0
    %2720 = vmatprep.mubr.bf16.mxu0 %v2042
    %2721 = vmatmul.mubr.bf16.gmra.mxu0 %v2041
    %v2722 = vpop.f32.mrf.mxu0
    %v2723 = vadd.f32 %v2230, %v2722
    %v2724 = vpop.f32.mrf.mxu0
    %v2725 = vpop.f32.mrf.mxu0
    %v2726 = vadd.f32 %v2230, %v2725
    %v2727 = vpop.f32.mrf.mxu0
    %2728 = vmatprep.mubr.bf16.mxu0 %v2050
    %2729 = vmatmul.mubr.bf16.gmra.mxu0 %v2049
    %v2730 = vpop.f32.mrf.mxu0
    %v2731 = vadd.f32 %v2230, %v2730
    %v2732 = vpop.f32.mrf.mxu0
    %v2733 = vpop.f32.mrf.mxu0
    %v2734 = vadd.f32 %v2230, %v2733
    %v2735 = vpop.f32.mrf.mxu0
    %2736 = vmatprep.mubr.bf16.mxu0 %v2058
    %2737 = vmatmul.mubr.bf16.gmra.mxu0 %v2057
    %v2738 = vpop.f32.mrf.mxu0
    %v2739 = vadd.f32 %v2230, %v2738
    %v2740 = vpop.f32.mrf.mxu0
    %v2741 = vpop.f32.mrf.mxu0
    %v2742 = vadd.f32 %v2230, %v2741
    %v2743 = vpop.f32.mrf.mxu0
    %2744 = vmatprep.mubr.bf16.mxu0 %v2066
    %2745 = vmatmul.mubr.bf16.gmra.mxu0 %v2065
    %v2746 = vpop.f32.mrf.mxu0
    %v2747 = vadd.f32 %v2230, %v2746
    %v2748 = vpop.f32.mrf.mxu0
    %v2749 = vpop.f32.mrf.mxu0
    %v2750 = vadd.f32 %v2230, %v2749
    %v2751 = vpop.f32.mrf.mxu0
    %2752 = vmatprep.mubr.bf16.mxu0 %v2074
    %2753 = vmatmul.mubr.bf16.gmra.mxu0 %v2073
    %v2754 = vpop.f32.mrf.mxu0
    %v2755 = vadd.f32 %v2230, %v2754
    %v2756 = vpop.f32.mrf.mxu0
    %v2757 = vpop.f32.mrf.mxu0
    %v2758 = vadd.f32 %v2230, %v2757
    %v2759 = vpop.f32.mrf.mxu0
    %2760 = vmatprep.mubr.bf16.mxu0 %v2082
    %2761 = vmatmul.mubr.bf16.gmra.mxu0 %v2081
    %v2762 = vpop.f32.mrf.mxu0
    %v2763 = vadd.f32 %v2230, %v2762
    %v2764 = vpop.f32.mrf.mxu0
    %v2765 = vpop.f32.mrf.mxu0
    %v2766 = vadd.f32 %v2230, %v2765
    %v2767 = vpop.f32.mrf.mxu0
    %2768 = vmatprep.mubr.bf16.mxu0 %v2090
    %2769 = vmatmul.mubr.bf16.gmra.mxu0 %v2089
    %v2770 = vpop.f32.mrf.mxu0
    %v2771 = vadd.f32 %v2230, %v2770
    %v2772 = vpop.f32.mrf.mxu0
    %v2773 = vpop.f32.mrf.mxu0
    %v2774 = vadd.f32 %v2230, %v2773
    %v2775 = vpop.f32.mrf.mxu0
    %2776 = vdwg.mxu0
    %2777 = vmatprep.subr.bf16.mxu0 0
    %2778 = vmatpush1.bf16.msra.mxu0 %v2511
    %2779 = vmatprep.subr.bf16.mxu0 0
    %2780 = vmatpush1.bf16.msra.mxu0 %v2510
    %2781 = vmatprep.subr.bf16.mxu0 0
    %2782 = vmatpush1.bf16.msra.mxu0 %v2509
    %2783 = vmatprep.subr.bf16.mxu0 0
    %2784 = vmatpush1.bf16.msra.mxu0 %v2508
    %2785 = vmatprep.subr.bf16.mxu0 0
    %2786 = vmatpush1.bf16.msra.mxu0 %v2507
    %2787 = vmatprep.subr.bf16.mxu0 0
    %2788 = vmatpush1.bf16.msra.mxu0 %v2506
    %2789 = vmatprep.subr.bf16.mxu0 0
    %2790 = vmatpush1.bf16.msra.mxu0 %v2505
    %2791 = vmatprep.subr.bf16.mxu0 0
    %2792 = vmatpush1.bf16.msra.mxu0 %v2504
    %2793 = vmatprep.subr.bf16.mxu0 0
    %2794 = vmatpush2.bf16.msra.mxu0 %v2519
    %2795 = vmatprep.subr.bf16.mxu0 0
    %2796 = vmatpush2.bf16.msra.mxu0 %v2518
    %2797 = vmatprep.subr.bf16.mxu0 0
    %2798 = vmatpush2.bf16.msra.mxu0 %v2517
    %2799 = vmatprep.subr.bf16.mxu0 0
    %2800 = vmatpush2.bf16.msra.mxu0 %v2516
    %2801 = vmatprep.subr.bf16.mxu0 0
    %2802 = vmatpush2.bf16.msra.mxu0 %v2515
    %2803 = vmatprep.subr.bf16.mxu0 0
    %2804 = vmatpush2.bf16.msra.mxu0 %v2514
    %2805 = vmatprep.subr.bf16.mxu0 0
    %2806 = vmatpush2.bf16.msra.mxu0 %v2513
    %2807 = vmatprep.subr.bf16.mxu0 0
    %2808 = vmatpush2.bf16.msra.mxu0 %v2512
    %2809 = vmatprep.mubr.bf16.mxu0 %v1972
    %2810 = vmatmul.mubr.bf16.gmra.mxu0 %v1971
    %v2811 = vpop.f32.mrf.mxu0
    %v2812 = vadd.f32 %v2651, %v2811
    %v2813 = vpop.f32.mrf.mxu0
    %v2814 = vpop.f32.mrf.mxu0
    %v2815 = vadd.f32 %v2654, %v2814
    %v2816 = vpop.f32.mrf.mxu0
    %2817 = vmatprep.mubr.bf16.mxu0 %v1980
    %2818 = vmatmul.mubr.bf16.gmra.mxu0 %v1979
    %v2819 = vpop.f32.mrf.mxu0
    %v2820 = vadd.f32 %v2659, %v2819
    %v2821 = vpop.f32.mrf.mxu0
    %v2822 = vpop.f32.mrf.mxu0
    %v2823 = vadd.f32 %v2662, %v2822
    %v2824 = vpop.f32.mrf.mxu0
    %2825 = vmatprep.mubr.bf16.mxu0 %v1988
    %2826 = vmatmul.mubr.bf16.gmra.mxu0 %v1987
    %v2827 = vpop.f32.mrf.mxu0
    %v2828 = vadd.f32 %v2667, %v2827
    %v2829 = vpop.f32.mrf.mxu0
    %v2830 = vpop.f32.mrf.mxu0
    %v2831 = vadd.f32 %v2670, %v2830
    %v2832 = vpop.f32.mrf.mxu0
    %2833 = vmatprep.mubr.bf16.mxu0 %v1996
    %2834 = vmatmul.mubr.bf16.gmra.mxu0 %v1995
    %v2835 = vpop.f32.mrf.mxu0
    %v2836 = vadd.f32 %v2675, %v2835
    %v2837 = vpop.f32.mrf.mxu0
    %v2838 = vpop.f32.mrf.mxu0
    %v2839 = vadd.f32 %v2678, %v2838
    %v2840 = vpop.f32.mrf.mxu0
    %2841 = vmatprep.mubr.bf16.mxu0 %v2004
    %2842 = vmatmul.mubr.bf16.gmra.mxu0 %v2003
    %v2843 = vpop.f32.mrf.mxu0
    %v2844 = vadd.f32 %v2683, %v2843
    %v2845 = vpop.f32.mrf.mxu0
    %v2846 = vpop.f32.mrf.mxu0
    %v2847 = vadd.f32 %v2686, %v2846
    %v2848 = vpop.f32.mrf.mxu0
    %2849 = vmatprep.mubr.bf16.mxu0 %v2012
    %2850 = vmatmul.mubr.bf16.gmra.mxu0 %v2011
    %v2851 = vpop.f32.mrf.mxu0
    %v2852 = vadd.f32 %v2691, %v2851
    %v2853 = vpop.f32.mrf.mxu0
    %v2854 = vpop.f32.mrf.mxu0
    %v2855 = vadd.f32 %v2694, %v2854
    %v2856 = vpop.f32.mrf.mxu0
    %2857 = vmatprep.mubr.bf16.mxu0 %v2020
    %2858 = vmatmul.mubr.bf16.gmra.mxu0 %v2019
    %v2859 = vpop.f32.mrf.mxu0
    %v2860 = vadd.f32 %v2699, %v2859
    %v2861 = vpop.f32.mrf.mxu0
    %v2862 = vpop.f32.mrf.mxu0
    %v2863 = vadd.f32 %v2702, %v2862
    %v2864 = vpop.f32.mrf.mxu0
    %2865 = vmatprep.mubr.bf16.mxu0 %v2028
    %2866 = vmatmul.mubr.bf16.gmra.mxu0 %v2027
    %v2867 = vpop.f32.mrf.mxu0
    %v2868 = vadd.f32 %v2707, %v2867
    %v2869 = vpop.f32.mrf.mxu0
    %v2870 = vpop.f32.mrf.mxu0
    %v2871 = vadd.f32 %v2710, %v2870
    %v2872 = vpop.f32.mrf.mxu0
    %2873 = vmatprep.mubr.bf16.mxu0 %v2036
    %2874 = vmatmul.mubr.bf16.gmra.mxu0 %v2035
    %v2875 = vpop.f32.mrf.mxu0
    %v2876 = vadd.f32 %v2715, %v2875
    %v2877 = vpop.f32.mrf.mxu0
    %v2878 = vpop.f32.mrf.mxu0
    %v2879 = vadd.f32 %v2718, %v2878
    %v2880 = vpop.f32.mrf.mxu0
    %2881 = vmatprep.mubr.bf16.mxu0 %v2044
    %2882 = vmatmul.mubr.bf16.gmra.mxu0 %v2043
    %v2883 = vpop.f32.mrf.mxu0
    %v2884 = vadd.f32 %v2723, %v2883
    %v2885 = vpop.f32.mrf.mxu0
    %v2886 = vpop.f32.mrf.mxu0
    %v2887 = vadd.f32 %v2726, %v2886
    %v2888 = vpop.f32.mrf.mxu0
    %2889 = vmatprep.mubr.bf16.mxu0 %v2052
    %2890 = vmatmul.mubr.bf16.gmra.mxu0 %v2051
    %v2891 = vpop.f32.mrf.mxu0
    %v2892 = vadd.f32 %v2731, %v2891
    %v2893 = vpop.f32.mrf.mxu0
    %v2894 = vpop.f32.mrf.mxu0
    %v2895 = vadd.f32 %v2734, %v2894
    %v2896 = vpop.f32.mrf.mxu0
    %2897 = vmatprep.mubr.bf16.mxu0 %v2060
    %2898 = vmatmul.mubr.bf16.gmra.mxu0 %v2059
    %v2899 = vpop.f32.mrf.mxu0
    %v2900 = vadd.f32 %v2739, %v2899
    %v2901 = vpop.f32.mrf.mxu0
    %v2902 = vpop.f32.mrf.mxu0
    %v2903 = vadd.f32 %v2742, %v2902
    %v2904 = vpop.f32.mrf.mxu0
    %2905 = vmatprep.mubr.bf16.mxu0 %v2068
    %2906 = vmatmul.mubr.bf16.gmra.mxu0 %v2067
    %v2907 = vpop.f32.mrf.mxu0
    %v2908 = vadd.f32 %v2747, %v2907
    %v2909 = vpop.f32.mrf.mxu0
    %v2910 = vpop.f32.mrf.mxu0
    %v2911 = vadd.f32 %v2750, %v2910
    %v2912 = vpop.f32.mrf.mxu0
    %2913 = vmatprep.mubr.bf16.mxu0 %v2076
    %2914 = vmatmul.mubr.bf16.gmra.mxu0 %v2075
    %v2915 = vpop.f32.mrf.mxu0
    %v2916 = vadd.f32 %v2755, %v2915
    %v2917 = vpop.f32.mrf.mxu0
    %v2918 = vpop.f32.mrf.mxu0
    %v2919 = vadd.f32 %v2758, %v2918
    %v2920 = vpop.f32.mrf.mxu0
    %2921 = vmatprep.mubr.bf16.mxu0 %v2084
    %2922 = vmatmul.mubr.bf16.gmra.mxu0 %v2083
    %v2923 = vpop.f32.mrf.mxu0
    %v2924 = vadd.f32 %v2763, %v2923
    %v2925 = vpop.f32.mrf.mxu0
    %v2926 = vpop.f32.mrf.mxu0
    %v2927 = vadd.f32 %v2766, %v2926
    %v2928 = vpop.f32.mrf.mxu0
    %2929 = vmatprep.mubr.bf16.mxu0 %v2092
    %2930 = vmatmul.mubr.bf16.gmra.mxu0 %v2091
    %v2931 = vpop.f32.mrf.mxu0
    %v2932 = vadd.f32 %v2771, %v2931
    %v2933 = vpop.f32.mrf.mxu0
    %v2934 = vpop.f32.mrf.mxu0
    %v2935 = vadd.f32 %v2774, %v2934
    %v2936 = vpop.f32.mrf.mxu0
    %2937 = vdwg.mxu0
    %2938 = vmatprep.subr.bf16.mxu0 0
    %2939 = vmatpush1.bf16.msra.mxu0 %v2527
    %2940 = vmatprep.subr.bf16.mxu0 0
    %2941 = vmatpush1.bf16.msra.mxu0 %v2526
    %2942 = vmatprep.subr.bf16.mxu0 0
    %2943 = vmatpush1.bf16.msra.mxu0 %v2525
    %2944 = vmatprep.subr.bf16.mxu0 0
    %2945 = vmatpush1.bf16.msra.mxu0 %v2524
    %2946 = vmatprep.subr.bf16.mxu0 0
    %2947 = vmatpush1.bf16.msra.mxu0 %v2523
    %2948 = vmatprep.subr.bf16.mxu0 0
    %2949 = vmatpush1.bf16.msra.mxu0 %v2522
    %2950 = vmatprep.subr.bf16.mxu0 0
    %2951 = vmatpush1.bf16.msra.mxu0 %v2521
    %2952 = vmatprep.subr.bf16.mxu0 0
    %2953 = vmatpush1.bf16.msra.mxu0 %v2520
    %2954 = vmatprep.subr.bf16.mxu0 0
    %2955 = vmatpush2.bf16.msra.mxu0 %v2535
    %2956 = vmatprep.subr.bf16.mxu0 0
    %2957 = vmatpush2.bf16.msra.mxu0 %v2534
    %2958 = vmatprep.subr.bf16.mxu0 0
    %2959 = vmatpush2.bf16.msra.mxu0 %v2533
    %2960 = vmatprep.subr.bf16.mxu0 0
    %2961 = vmatpush2.bf16.msra.mxu0 %v2532
    %2962 = vmatprep.subr.bf16.mxu0 0
    %2963 = vmatpush2.bf16.msra.mxu0 %v2531
    %2964 = vmatprep.subr.bf16.mxu0 0
    %2965 = vmatpush2.bf16.msra.mxu0 %v2530
    %2966 = vmatprep.subr.bf16.mxu0 0
    %2967 = vmatpush2.bf16.msra.mxu0 %v2529
    %2968 = vmatprep.subr.bf16.mxu0 0
    %2969 = vmatpush2.bf16.msra.mxu0 %v2528
    %2970 = vmatprep.mubr.bf16.mxu0 %v1974
    %2971 = vmatmul.mubr.bf16.gmra.mxu0 %v1973
    %v2972 = vpop.f32.mrf.mxu0
    %v2973 = vadd.f32 %v2812, %v2972
    %v2974 = vpop.f32.mrf.mxu0
    %v2975 = vpop.f32.mrf.mxu0
    %v2976 = vadd.f32 %v2815, %v2975
    %v2977 = vpop.f32.mrf.mxu0
    %2978 = vmatprep.mubr.bf16.mxu0 %v1982
    %2979 = vmatmul.mubr.bf16.gmra.mxu0 %v1981
    %v2980 = vpop.f32.mrf.mxu0
    %v2981 = vadd.f32 %v2820, %v2980
    %v2982 = vpop.f32.mrf.mxu0
    %v2983 = vpop.f32.mrf.mxu0
    %v2984 = vadd.f32 %v2823, %v2983
    %v2985 = vpop.f32.mrf.mxu0
    %2986 = vmatprep.mubr.bf16.mxu0 %v1990
    %2987 = vmatmul.mubr.bf16.gmra.mxu0 %v1989
    %v2988 = vpop.f32.mrf.mxu0
    %v2989 = vadd.f32 %v2828, %v2988
    %v2990 = vpop.f32.mrf.mxu0
    %v2991 = vpop.f32.mrf.mxu0
    %v2992 = vadd.f32 %v2831, %v2991
    %v2993 = vpop.f32.mrf.mxu0
    %2994 = vmatprep.mubr.bf16.mxu0 %v1998
    %2995 = vmatmul.mubr.bf16.gmra.mxu0 %v1997
    %v2996 = vpop.f32.mrf.mxu0
    %v2997 = vadd.f32 %v2836, %v2996
    %v2998 = vpop.f32.mrf.mxu0
    %v2999 = vpop.f32.mrf.mxu0
    %v3000 = vadd.f32 %v2839, %v2999
    %v3001 = vpop.f32.mrf.mxu0
    %3002 = vmatprep.mubr.bf16.mxu0 %v2006
    %3003 = vmatmul.mubr.bf16.gmra.mxu0 %v2005
    %v3004 = vpop.f32.mrf.mxu0
    %v3005 = vadd.f32 %v2844, %v3004
    %v3006 = vpop.f32.mrf.mxu0
    %v3007 = vpop.f32.mrf.mxu0
    %v3008 = vadd.f32 %v2847, %v3007
    %v3009 = vpop.f32.mrf.mxu0
    %3010 = vmatprep.mubr.bf16.mxu0 %v2014
    %3011 = vmatmul.mubr.bf16.gmra.mxu0 %v2013
    %v3012 = vpop.f32.mrf.mxu0
    %v3013 = vadd.f32 %v2852, %v3012
    %v3014 = vpop.f32.mrf.mxu0
    %v3015 = vpop.f32.mrf.mxu0
    %v3016 = vadd.f32 %v2855, %v3015
    %v3017 = vpop.f32.mrf.mxu0
    %3018 = vmatprep.mubr.bf16.mxu0 %v2022
    %3019 = vmatmul.mubr.bf16.gmra.mxu0 %v2021
    %v3020 = vpop.f32.mrf.mxu0
    %v3021 = vadd.f32 %v2860, %v3020
    %v3022 = vpop.f32.mrf.mxu0
    %v3023 = vpop.f32.mrf.mxu0
    %v3024 = vadd.f32 %v2863, %v3023
    %v3025 = vpop.f32.mrf.mxu0
    %3026 = vmatprep.mubr.bf16.mxu0 %v2030
    %3027 = vmatmul.mubr.bf16.gmra.mxu0 %v2029
    %v3028 = vpop.f32.mrf.mxu0
    %v3029 = vadd.f32 %v2868, %v3028
    %v3030 = vpop.f32.mrf.mxu0
    %v3031 = vpop.f32.mrf.mxu0
    %v3032 = vadd.f32 %v2871, %v3031
    %v3033 = vpop.f32.mrf.mxu0
    %3034 = vmatprep.mubr.bf16.mxu0 %v2038
    %3035 = vmatmul.mubr.bf16.gmra.mxu0 %v2037
    %v3036 = vpop.f32.mrf.mxu0
    %v3037 = vadd.f32 %v2876, %v3036
    %v3038 = vpop.f32.mrf.mxu0
    %v3039 = vpop.f32.mrf.mxu0
    %v3040 = vadd.f32 %v2879, %v3039
    %v3041 = vpop.f32.mrf.mxu0
    %3042 = vmatprep.mubr.bf16.mxu0 %v2046
    %3043 = vmatmul.mubr.bf16.gmra.mxu0 %v2045
    %v3044 = vpop.f32.mrf.mxu0
    %v3045 = vadd.f32 %v2884, %v3044
    %v3046 = vpop.f32.mrf.mxu0
    %v3047 = vpop.f32.mrf.mxu0
    %v3048 = vadd.f32 %v2887, %v3047
    %v3049 = vpop.f32.mrf.mxu0
    %3050 = vmatprep.mubr.bf16.mxu0 %v2054
    %3051 = vmatmul.mubr.bf16.gmra.mxu0 %v2053
    %v3052 = vpop.f32.mrf.mxu0
    %v3053 = vadd.f32 %v2892, %v3052
    %v3054 = vpop.f32.mrf.mxu0
    %v3055 = vpop.f32.mrf.mxu0
    %v3056 = vadd.f32 %v2895, %v3055
    %v3057 = vpop.f32.mrf.mxu0
    %3058 = vmatprep.mubr.bf16.mxu0 %v2062
    %3059 = vmatmul.mubr.bf16.gmra.mxu0 %v2061
    %v3060 = vpop.f32.mrf.mxu0
    %v3061 = vadd.f32 %v2900, %v3060
    %v3062 = vpop.f32.mrf.mxu0
    %v3063 = vpop.f32.mrf.mxu0
    %v3064 = vadd.f32 %v2903, %v3063
    %v3065 = vpop.f32.mrf.mxu0
    %3066 = vmatprep.mubr.bf16.mxu0 %v2070
    %3067 = vmatmul.mubr.bf16.gmra.mxu0 %v2069
    %v3068 = vpop.f32.mrf.mxu0
    %v3069 = vadd.f32 %v2908, %v3068
    %v3070 = vpop.f32.mrf.mxu0
    %v3071 = vpop.f32.mrf.mxu0
    %v3072 = vadd.f32 %v2911, %v3071
    %v3073 = vpop.f32.mrf.mxu0
    %3074 = vmatprep.mubr.bf16.mxu0 %v2078
    %3075 = vmatmul.mubr.bf16.gmra.mxu0 %v2077
    %v3076 = vpop.f32.mrf.mxu0
    %v3077 = vadd.f32 %v2916, %v3076
    %v3078 = vpop.f32.mrf.mxu0
    %v3079 = vpop.f32.mrf.mxu0
    %v3080 = vadd.f32 %v2919, %v3079
    %v3081 = vpop.f32.mrf.mxu0
    %3082 = vmatprep.mubr.bf16.mxu0 %v2086
    %3083 = vmatmul.mubr.bf16.gmra.mxu0 %v2085
    %v3084 = vpop.f32.mrf.mxu0
    %v3085 = vadd.f32 %v2924, %v3084
    %v3086 = vpop.f32.mrf.mxu0
    %v3087 = vpop.f32.mrf.mxu0
    %v3088 = vadd.f32 %v2927, %v3087
    %v3089 = vpop.f32.mrf.mxu0
    %3090 = vmatprep.mubr.bf16.mxu0 %v2094
    %3091 = vmatmul.mubr.bf16.gmra.mxu0 %v2093
    %v3092 = vpop.f32.mrf.mxu0
    %v3093 = vadd.f32 %v2932, %v3092
    %v3094 = vpop.f32.mrf.mxu0
    %v3095 = vpop.f32.mrf.mxu0
    %v3096 = vadd.f32 %v2935, %v3095
    %v3097 = vpop.f32.mrf.mxu0
    %3098 = vdwg.mxu0
    %3099 = vmatprep.subr.bf16.mxu0 0
    %3100 = vmatpush1.bf16.msra.mxu0 %v2543
    %3101 = vmatprep.subr.bf16.mxu0 0
    %3102 = vmatpush1.bf16.msra.mxu0 %v2542
    %3103 = vmatprep.subr.bf16.mxu0 0
    %3104 = vmatpush1.bf16.msra.mxu0 %v2541
    %3105 = vmatprep.subr.bf16.mxu0 0
    %3106 = vmatpush1.bf16.msra.mxu0 %v2540
    %3107 = vmatprep.subr.bf16.mxu0 0
    %3108 = vmatpush1.bf16.msra.mxu0 %v2539
    %3109 = vmatprep.subr.bf16.mxu0 0
    %3110 = vmatpush1.bf16.msra.mxu0 %v2538
    %3111 = vmatprep.subr.bf16.mxu0 0
    %3112 = vmatpush1.bf16.msra.mxu0 %v2537
    %3113 = vmatprep.subr.bf16.mxu0 0
    %3114 = vmatpush1.bf16.msra.mxu0 %v2536
    %3115 = vmatprep.subr.bf16.mxu0 0
    %3116 = vmatpush2.bf16.msra.mxu0 %v2551
    %3117 = vmatprep.subr.bf16.mxu0 0
    %3118 = vmatpush2.bf16.msra.mxu0 %v2550
    %3119 = vmatprep.subr.bf16.mxu0 0
    %3120 = vmatpush2.bf16.msra.mxu0 %v2549
    %3121 = vmatprep.subr.bf16.mxu0 0
    %3122 = vmatpush2.bf16.msra.mxu0 %v2548
    %3123 = vmatprep.subr.bf16.mxu0 0
    %3124 = vmatpush2.bf16.msra.mxu0 %v2547
    %3125 = vmatprep.subr.bf16.mxu0 0
    %3126 = vmatpush2.bf16.msra.mxu0 %v2546
    %3127 = vmatprep.subr.bf16.mxu0 0
    %3128 = vmatpush2.bf16.msra.mxu0 %v2545
    %3129 = vmatprep.subr.bf16.mxu0 0
    %3130 = vmatpush2.bf16.msra.mxu0 %v2544
    %3131 = vmatprep.mubr.bf16.mxu0 %v1976
    %3132 = vmatmul.mubr.bf16.gmra.mxu0 %v1975
    %v3133 = vpop.f32.mrf.mxu0
    %v3134 = vadd.f32 %v2973, %v3133
    %v3135 = vpop.f32.mrf.mxu0
    %v3136 = vpop.f32.mrf.mxu0
    %v3137 = vadd.f32 %v2976, %v3136
    %v3138 = vpop.f32.mrf.mxu0
    %3139 = vmatprep.mubr.bf16.mxu0 %v1984
    %3140 = vmatmul.mubr.bf16.gmra.mxu0 %v1983
    %v3141 = vpop.f32.mrf.mxu0
    %v3142 = vadd.f32 %v2981, %v3141
    %v3143 = vpop.f32.mrf.mxu0
    %v3144 = vpop.f32.mrf.mxu0
    %v3145 = vadd.f32 %v2984, %v3144
    %v3146 = vpop.f32.mrf.mxu0
    %3147 = vmatprep.mubr.bf16.mxu0 %v1992
    %3148 = vmatmul.mubr.bf16.gmra.mxu0 %v1991
    %v3149 = vpop.f32.mrf.mxu0
    %v3150 = vadd.f32 %v2989, %v3149
    %v3151 = vpop.f32.mrf.mxu0
    %v3152 = vpop.f32.mrf.mxu0
    %v3153 = vadd.f32 %v2992, %v3152
    %v3154 = vpop.f32.mrf.mxu0
    %3155 = vmatprep.mubr.bf16.mxu0 %v2000
    %3156 = vmatmul.mubr.bf16.gmra.mxu0 %v1999
    %v3157 = vpop.f32.mrf.mxu0
    %v3158 = vadd.f32 %v2997, %v3157
    %v3159 = vpop.f32.mrf.mxu0
    %v3160 = vpop.f32.mrf.mxu0
    %v3161 = vadd.f32 %v3000, %v3160
    %v3162 = vpop.f32.mrf.mxu0
    %3163 = vmatprep.mubr.bf16.mxu0 %v2008
    %3164 = vmatmul.mubr.bf16.gmra.mxu0 %v2007
    %v3165 = vpop.f32.mrf.mxu0
    %v3166 = vadd.f32 %v3005, %v3165
    %v3167 = vpop.f32.mrf.mxu0
    %v3168 = vpop.f32.mrf.mxu0
    %v3169 = vadd.f32 %v3008, %v3168
    %v3170 = vpop.f32.mrf.mxu0
    %3171 = vmatprep.mubr.bf16.mxu0 %v2016
    %3172 = vmatmul.mubr.bf16.gmra.mxu0 %v2015
    %v3173 = vpop.f32.mrf.mxu0
    %v3174 = vadd.f32 %v3013, %v3173
    %v3175 = vpop.f32.mrf.mxu0
    %v3176 = vpop.f32.mrf.mxu0
    %v3177 = vadd.f32 %v3016, %v3176
    %v3178 = vpop.f32.mrf.mxu0
    %3179 = vmatprep.mubr.bf16.mxu0 %v2024
    %3180 = vmatmul.mubr.bf16.gmra.mxu0 %v2023
    %v3181 = vpop.f32.mrf.mxu0
    %v3182 = vadd.f32 %v3021, %v3181
    %v3183 = vpop.f32.mrf.mxu0
    %v3184 = vpop.f32.mrf.mxu0
    %v3185 = vadd.f32 %v3024, %v3184
    %v3186 = vpop.f32.mrf.mxu0
    %3187 = vmatprep.mubr.bf16.mxu0 %v2032
    %3188 = vmatmul.mubr.bf16.gmra.mxu0 %v2031
    %v3189 = vpop.f32.mrf.mxu0
    %v3190 = vadd.f32 %v3029, %v3189
    %v3191 = vpop.f32.mrf.mxu0
    %v3192 = vpop.f32.mrf.mxu0
    %v3193 = vadd.f32 %v3032, %v3192
    %v3194 = vpop.f32.mrf.mxu0
    %3195 = vmatprep.mubr.bf16.mxu0 %v2040
    %3196 = vmatmul.mubr.bf16.gmra.mxu0 %v2039
    %v3197 = vpop.f32.mrf.mxu0
    %v3198 = vadd.f32 %v3037, %v3197
    %v3199 = vpop.f32.mrf.mxu0
    %v3200 = vpop.f32.mrf.mxu0
    %v3201 = vadd.f32 %v3040, %v3200
    %v3202 = vpop.f32.mrf.mxu0
    %3203 = vmatprep.mubr.bf16.mxu0 %v2048
    %3204 = vmatmul.mubr.bf16.gmra.mxu0 %v2047
    %v3205 = vpop.f32.mrf.mxu0
    %v3206 = vadd.f32 %v3045, %v3205
    %v3207 = vpop.f32.mrf.mxu0
    %v3208 = vpop.f32.mrf.mxu0
    %v3209 = vadd.f32 %v3048, %v3208
    %v3210 = vpop.f32.mrf.mxu0
    %3211 = vmatprep.mubr.bf16.mxu0 %v2056
    %3212 = vmatmul.mubr.bf16.gmra.mxu0 %v2055
    %v3213 = vpop.f32.mrf.mxu0
    %v3214 = vadd.f32 %v3053, %v3213
    %v3215 = vpop.f32.mrf.mxu0
    %v3216 = vpop.f32.mrf.mxu0
    %v3217 = vadd.f32 %v3056, %v3216
    %v3218 = vpop.f32.mrf.mxu0
    %3219 = vmatprep.mubr.bf16.mxu0 %v2064
    %3220 = vmatmul.mubr.bf16.gmra.mxu0 %v2063
    %v3221 = vpop.f32.mrf.mxu0
    %v3222 = vadd.f32 %v3061, %v3221
    %v3223 = vpop.f32.mrf.mxu0
    %v3224 = vpop.f32.mrf.mxu0
    %v3225 = vadd.f32 %v3064, %v3224
    %v3226 = vpop.f32.mrf.mxu0
    %3227 = vmatprep.mubr.bf16.mxu0 %v2072
    %3228 = vmatmul.mubr.bf16.gmra.mxu0 %v2071
    %v3229 = vpop.f32.mrf.mxu0
    %v3230 = vadd.f32 %v3069, %v3229
    %v3231 = vpop.f32.mrf.mxu0
    %v3232 = vpop.f32.mrf.mxu0
    %v3233 = vadd.f32 %v3072, %v3232
    %v3234 = vpop.f32.mrf.mxu0
    %3235 = vmatprep.mubr.bf16.mxu0 %v2080
    %3236 = vmatmul.mubr.bf16.gmra.mxu0 %v2079
    %v3237 = vpop.f32.mrf.mxu0
    %v3238 = vadd.f32 %v3077, %v3237
    %v3239 = vpop.f32.mrf.mxu0
    %v3240 = vpop.f32.mrf.mxu0
    %v3241 = vadd.f32 %v3080, %v3240
    %v3242 = vpop.f32.mrf.mxu0
    %3243 = vmatprep.mubr.bf16.mxu0 %v2088
    %3244 = vmatmul.mubr.bf16.gmra.mxu0 %v2087
    %v3245 = vpop.f32.mrf.mxu0
    %v3246 = vadd.f32 %v3085, %v3245
    %v3247 = vpop.f32.mrf.mxu0
    %v3248 = vpop.f32.mrf.mxu0
    %v3249 = vadd.f32 %v3088, %v3248
    %v3250 = vpop.f32.mrf.mxu0
    %3251 = vmatprep.mubr.bf16.mxu0 %v2096
    %3252 = vmatmul.mubr.bf16.gmra.mxu0 %v2095
    %v3253 = vpop.f32.mrf.mxu0
    %v3254 = vadd.f32 %v3093, %v3253
    %v3255 = vpop.f32.mrf.mxu0
    %v3256 = vpop.f32.mrf.mxu0
    %v3257 = vadd.f32 %v3096, %v3256
    %v3258 = vpop.f32.mrf.mxu0
    %3259 = vdwg.mxu0
    %3260 = vst [vmem:[%s5] sm:$0xff] %v3134
    %3261 = vst [vmem:[%s5 + $0x8] sm:$0xff] %v3137
    %3262 = vst [vmem:[%s5 + $0x10] sm:$0xff] %v3142
    %3263 = vst [vmem:[%s5 + $0x18] sm:$0xff] %v3145
    %3264 = vst [vmem:[%s5 + $0x20] sm:$0xff] %v3150
    %3265 = vst [vmem:[%s5 + $0x28] sm:$0xff] %v3153
    %3266 = vst [vmem:[%s5 + $0x30] sm:$0xff] %v3158
    %3267 = vst [vmem:[%s5 + $0x38] sm:$0xff] %v3161
    %3268 = vst [vmem:[%s5 + $0x40] sm:$0xff] %v3166
    %3269 = vst [vmem:[%s5 + $0x48] sm:$0xff] %v3169
    %3270 = vst [vmem:[%s5 + $0x50] sm:$0xff] %v3174
    %3271 = vst [vmem:[%s5 + $0x58] sm:$0xff] %v3177
    %3272 = vst [vmem:[%s5 + $0x60] sm:$0xff] %v3182
    %3273 = vst [vmem:[%s5 + $0x68] sm:$0xff] %v3185
    %3274 = vst [vmem:[%s5 + $0x70] sm:$0xff] %v3190
    %3275 = vst [vmem:[%s5 + $0x78] sm:$0xff] %v3193
    %3276 = vst [vmem:[%s5 + $0x80] sm:$0xff] %v3198
    %3277 = vst [vmem:[%s5 + $0x88] sm:$0xff] %v3201
    %3278 = vst [vmem:[%s5 + $0x90] sm:$0xff] %v3206
    %3279 = vst [vmem:[%s5 + $0x98] sm:$0xff] %v3209
    %3280 = vst [vmem:[%s5 + $0xa0] sm:$0xff] %v3214
    %3281 = vst [vmem:[%s5 + $0xa8] sm:$0xff] %v3217
    %3282 = vst [vmem:[%s5 + $0xb0] sm:$0xff] %v3222
    %3283 = vst [vmem:[%s5 + $0xb8] sm:$0xff] %v3225
    %3284 = vst [vmem:[%s5 + $0xc0] sm:$0xff] %v3230
    %3285 = vst [vmem:[%s5 + $0xc8] sm:$0xff] %v3233
    %3286 = vst [vmem:[%s5 + $0xd0] sm:$0xff] %v3238
    %3287 = vst [vmem:[%s5 + $0xd8] sm:$0xff] %v3241
    %3288 = vst [vmem:[%s5 + $0xe0] sm:$0xff] %v3246
    %3289 = vst [vmem:[%s5 + $0xe8] sm:$0xff] %v3249
    %3290 = vst [vmem:[%s5 + $0xf0] sm:$0xff] %v3254
    %3291 = vst [vmem:[%s5 + $0xf8] sm:$0xff] %v3257
    // Predicated region
    $region26: #{mlp_forward.1} parent=1 // pred_check
      _
    $region27: #{mlp_forward.1} parent=1 // pred_check_branch
      %3293 = sbr.rel (0) target = $region29
    $region28: #{mlp_forward.1} parent=1 // pred_region
      _
    $region29: #{mlp_forward.1} parent=1 // pred_fallthru
      _
    // Predicated region
    $region30: #{mlp_forward.1} parent=1 // pred_check
      _
    $region31: #{mlp_forward.1} parent=1 // pred_check_branch
      %3295 = sbr.rel (0) target = $region33
    $region32: #{mlp_forward.1} parent=1 // pred_region
      _
    $region33: #{mlp_forward.1} parent=1 // pred_fallthru
      _
    %3296 = vsyncpa [#allocation3], 1

</llo_original>
